<compile_context>
chip_gen: v7x
topology: tpu7x:2x2x1
jax: 0.10.0
libtpu: 0.0.40
codegen_flags: <defaults>
</compile_context>

<pallas_src>
import functools

import jax
import jax.numpy as jnp
from jax import lax
from jax.experimental import pallas as pl
from jax.experimental.pallas import tpu as pltpu

LANE = 128


def _round_up(x, m):
    return ((x + m - 1) // m) * m


_VMEM_CAP = []


def _vmem_capacity_bytes():
    """Physical VMEM per TensorCore (128 MiB v5e/v6e, 64 MiB v7x)."""
    if not _VMEM_CAP:
        cap = 64 << 20  # conservative fallback (v7x per-TC VMEM)
        try:
            cap = int(pltpu.get_tpu_info().vmem_capacity_bytes)
        except Exception:
            pass
        _VMEM_CAP.append(cap)
    return _VMEM_CAP[0]


def _choose_s_chunk(S):
    """Pooled-axis sub-chunk.  Keep the whole nsample axis in one tile when
    S <= 64 (larger contiguous DMA bursts, no reduction grid axis); otherwise
    split into multiples of 16 (safe bf16 sublane packing)."""
    if S <= 64:
        return S
    for c in (64, 32, 16):
        if S % c == 0:
            return c
    return S


# ----------------------------------------------------------------------------
# Pallas kernel: pointwise MLP (stack of 1x1 convs + ReLU) + running max over
# the nsample axis, stored channels-first.
# ----------------------------------------------------------------------------
def _make_mlp_max_kernel(num_layers, s_chunk, n_s):
    def kernel(x_ref, *rest):
        # rest = [w0, b0, ..., w_{L-1}, b_{L-1}, o_ref]
        o_ref = rest[2 * num_layers]
        tm = x_ref.shape[1]
        cin = x_ref.shape[3]

        # (1, tm, s_chunk, Cin) -> (tm*s_chunk, Cin).  s_chunk is the full
        # nsample axis or a multiple of 16, so this merge stays cheap.
        h = x_ref[0].reshape(tm * s_chunk, cin)  # bf16

        for l in range(num_layers):
            w = rest[2 * l][...]        # (C_l, C_{l+1}) bf16
            b = rest[2 * l + 1][...]    # (1, C_{l+1})   f32
            a = jnp.dot(h, w, preferred_element_type=jnp.float32)  # MXU, f32 acc
            a = jnp.maximum(a + b, 0.0)  # Conv1x1 + (folded BN) + ReLU, f32 VPU
            h = a.astype(jnp.bfloat16) if l + 1 < num_layers else a

        # max over the nsample sub-chunk, then transpose on the XLU so the
        # store is already channels-first (no wrapper-side transpose).
        chunk_max = jnp.max(h.reshape(tm, s_chunk, -1), axis=1)  # (tm, cpad) f32
        chunk_t = chunk_max.T                                     # (cpad, tm)

        if n_s == 1:
            o_ref[0] = chunk_t
        else:
            s_idx = pl.program_id(2)

            @pl.when(s_idx == 0)
            def _():
                o_ref[0] = chunk_t

            @pl.when(s_idx > 0)
            def _():
                o_ref[0] = jnp.maximum(o_ref[0], chunk_t)

    return kernel


def mlp_and_maxpool(x, weights, biases):
    """x: (B, P, S, Cin) bf16 grouped features.
    weights: list of (C_l, C_{l+1}) bf16, last layer zero-padded to a multiple
    of 128 output channels.  biases: list of (1, C_{l+1}) f32.
    Returns (B, cpad, P) f32 = max over S of the pointwise MLP (channels-first)."""
    B, P, S, Cin = x.shape
    num_layers = len(weights)
    cpad = weights[-1].shape[1]
    assert cpad % LANE == 0  # lane-dense padded channel axis

    s_chunk = _choose_s_chunk(S)
    n_s = S // s_chunk

    # --- generation-aware VMEM budget ------------------------------------
    vmem_cap = _vmem_capacity_bytes()
    vmem_limit = max((vmem_cap * 3) // 4, 32 << 20)
    vmem_limit = min(vmem_limit, vmem_cap - (4 << 20))

    cin_pad = _round_up(Cin, LANE)          # lane padding of the input block
    s_pad = _round_up(s_chunk, 16)          # bf16 sublane packing
    c_big = max([cpad] + [w.shape[1] for w in weights])
    c_big_pad = _round_up(c_big, LANE)
    # Grid-invariant weights/biases are still double-buffered by the pipeliner;
    # they are small, just count them.
    wb_bytes = 2 * sum(
        _round_up(w.shape[0], 16) * _round_up(w.shape[1], LANE) * 2
        + 8 * _round_up(bb.shape[1], LANE) * 4
        for w, bb in zip(weights, biases))

    def slab_bytes(tm):                     # one live f32 activation slab
        return tm * s_chunk * c_big_pad * 4

    def fits(tm):
        in_bytes = 2 * tm * s_pad * cin_pad * 2   # double-buffered bf16 input
        act_bytes = 3 * slab_bytes(tm)            # ~3 live slabs (h, a, chunk_max)
        out_bytes = 2 * cpad * tm * 4             # double-buffered f32 output
        reserve = 2 << 20                         # Mosaic internal scratch
        return in_bytes + act_bytes + out_bytes + wb_bytes + reserve <= vmem_limit

    # Legal row tiles: tm must divide npoint (a tile never straddles a batch)
    # and the transposed output block's last (lane) dim is tm, so it must be a
    # multiple of 128 or the full npoint axis.
    cands = [d for d in range(P, 0, -1)
             if P % d == 0 and (d % LANE == 0 or d == P)]

    def n_par(tm):                           # parallel grid blocks (megacore)
        return B * (P // tm)

    slab_cap = 8 << 20                       # keep f32 intermediates small
    tm = None
    for pred in (
        lambda t: fits(t) and slab_bytes(t) <= slab_cap
                  and n_par(t) >= 2 and n_par(t) % 2 == 0,
        lambda t: fits(t) and slab_bytes(t) <= slab_cap and n_par(t) >= 2,
        lambda t: fits(t) and slab_bytes(t) <= slab_cap,
        lambda t: fits(t),
    ):
        ok = [t for t in cands if pred(t)]
        if ok:
            tm = max(ok)
            break
    if tm is None:
        tm = min(cands)

    kernel = _make_mlp_max_kernel(num_layers, s_chunk, n_s)

    if n_s > 1:
        grid = (B, P // tm, n_s)                      # nsample reduction last
        x_map = lambda b, i, s: (b, i, s, 0)
        c_map = lambda b, i, s: (0, 0)
        o_map = lambda b, i, s: (b, 0, i)
        dims = ("parallel", "parallel", "arbitrary")
    else:
        grid = (B, P // tm)                           # fully parallel grid
        x_map = lambda b, i: (b, i, 0, 0)
        c_map = lambda b, i: (0, 0)
        o_map = lambda b, i: (b, 0, i)
        dims = ("parallel", "parallel")

    in_specs = [pl.BlockSpec((1, tm, s_chunk, Cin), x_map)]
    args = [x]
    for w, bb in zip(weights, biases):
        in_specs.append(pl.BlockSpec(w.shape, c_map))   # grid-invariant: hoisted
        in_specs.append(pl.BlockSpec(bb.shape, c_map))
        args += [w, bb]

    return pl.pallas_call(
        kernel,
        out_shape=jax.ShapeDtypeStruct((B, cpad, P), jnp.float32),
        grid_spec=pltpu.PrefetchScalarGridSpec(
            num_scalar_prefetch=0,
            grid=grid,
            in_specs=in_specs,
            out_specs=pl.BlockSpec((1, cpad, tm), o_map),
        ),
        compiler_params=pltpu.CompilerParams(
            dimension_semantics=dims,
            vmem_limit_bytes=int(vmem_limit),
        ),
    )(*args)


# ----------------------------------------------------------------------------
# Plain-JAX glue: FPS, ball query, grouping (data-dependent gathers)
# ----------------------------------------------------------------------------
def furthest_point_sample(xyz, npoint):
    """xyz: (B, N, 3) -> (B, npoint) int32.  (weights 1.0/0.0 == plain FPS)"""
    B, N, _ = xyz.shape

    def body(i, state):
        dists, farthest, idxs = state
        idxs = idxs.at[:, i].set(farthest)
        centroid = jax.vmap(lambda p, f: p[f])(xyz, farthest)[:, None, :]
        d = jnp.sum((xyz - centroid) ** 2, axis=-1)
        dists = jnp.minimum(dists, d)
        farthest = jnp.argmax(dists, axis=-1).astype(jnp.int32)
        return dists, farthest, idxs

    state = (jnp.full((B, N), 1e10, jnp.float32),
             jnp.zeros((B,), jnp.int32),
             jnp.zeros((B, npoint), jnp.int32))
    _, _, idxs = lax.fori_loop(0, npoint, body, state)
    return idxs


def ball_query(radius, nsample, xyz, new_xyz):
    """xyz: (B, N, 3), new_xyz: (B, M, 3) -> (B, M, nsample) int32.

    Matches the CUDA kernel: first `nsample` in-radius indices, padded with the
    first in-radius index (0 if none).  Uses top_k (partial selection)."""
    N = xyz.shape[1]
    d2 = jnp.sum((new_xyz[:, :, None, :] - xyz[:, None, :, :]) ** 2, axis=-1)
    mask = d2 < radius ** 2
    keyed = jnp.where(mask, jnp.arange(N, dtype=jnp.int32)[None, None, :], N)

    k = min(nsample, N)
    neg_vals, _ = lax.top_k(-keyed, k)          # smallest keyed, ascending
    sorted_idx = -neg_vals
    if k < nsample:
        pad = jnp.full(sorted_idx.shape[:-1] + (nsample - k,), N, jnp.int32)
        sorted_idx = jnp.concatenate([sorted_idx, pad], axis=-1)

    first = sorted_idx[..., :1]
    first = jnp.where(first == N, 0, first)
    idx = jnp.where(sorted_idx == N, first, sorted_idx)
    return idx.astype(jnp.int32)


def group_points(points_bnc, idx):
    """points: (B, N, C), idx: (B, P, S) -> (B, P, S, C)"""
    return jax.vmap(lambda p, i: p[i])(points_bnc, idx)


# ----------------------------------------------------------------------------
# PointNetSAModuleMSG forward
# ----------------------------------------------------------------------------
def pointnet_sa_module_msg(xyz, features, params, *, npoint, radii, nsamples,
                           use_xyz=True):
    """xyz: (B, N, 3), features: (B, C, N)
    -> new_xyz: (B, npoint, 3), new_features: (B, sum(Cout_i), npoint)"""
    B, N, _ = xyz.shape
    fps_idx = furthest_point_sample(xyz, npoint)                 # (B, npoint)
    new_xyz = jax.vmap(lambda p, i: p[i])(xyz, fps_idx)          # (B, npoint, 3)
    feats_bnc = jnp.transpose(features, (0, 2, 1))               # (B, N, C)
    feats_bf16 = feats_bnc.astype(jnp.bfloat16)                  # halve gather bytes

    outs = []
    for i, (r, ns) in enumerate(zip(radii, nsamples)):
        idx = ball_query(r, ns, xyz, new_xyz)                    # (B, npoint, ns)
        g_xyz = (group_points(xyz, idx)
                 - new_xyz[:, :, None, :]).astype(jnp.bfloat16)  # (B, npoint, ns, 3)
        if use_xyz:
            g = jnp.concatenate([g_xyz, group_points(feats_bf16, idx)], axis=-1)
        else:
            g = group_points(feats_bf16, idx)                    # (B, npoint, ns, C)

        weights, biases = params[i]
        c_out = weights[-1].shape[1]
        cpad = _round_up(max(c_out, LANE), LANE)   # lane-dense padded channel slab
        if cpad != c_out:
            weights = list(weights[:-1]) + [
                jnp.pad(weights[-1], ((0, 0), (0, cpad - c_out)))]
            biases = list(biases[:-1]) + [
                jnp.pad(biases[-1], ((0, 0), (0, cpad - c_out)))]
        w_bf16 = [w.astype(jnp.bfloat16) for w in weights]       # MXU bf16 inputs
        b_f32 = [b.astype(jnp.float32) for b in biases]          # f32 epilogue

        out = mlp_and_maxpool(g, w_bf16, b_f32)   # (B, cpad, npoint) f32, channels-first
        outs.append(out[:, :c_out, :])            # (B, Cout_i, npoint)

    return new_xyz, jnp.concatenate(outs, axis=1)


def init_params(key, in_channel, mlps, use_xyz=True):
    """Deterministic synthetic weights: per scale, list of (Cin, Cout) + (1, Cout)."""
    params = []
    for mlp in mlps:
        layers = [in_channel + (3 if use_xyz else 0)] + list(mlp)
        ws, bs = [], []
        for cin, cout in zip(layers[:-1], layers[1:]):
            key, k1, k2 = jax.random.split(key, 3)
            ws.append(jax.random.normal(k1, (cin, cout), jnp.float32) * 0.1)
            bs.append(jax.random.normal(k2, (1, cout), jnp.float32) * 0.1)
        params.append((ws, bs))
    return params


if __name__ == "__main__":
    key = jax.random.PRNGKey(0)
    kx, kf, kp = jax.random.split(key, 3)

    B, N, C = 2, 16, 4
    npoint = 8
    radii = [0.2, 0.4]
    nsamples = [8, 16]
    mlps = [[8, 16], [8, 32]]

    xyz = jax.random.uniform(kx, (B, N, 3), jnp.float32)
    features = jax.random.normal(kf, (B, C, N), jnp.float32)
    params = init_params(kp, C, mlps, use_xyz=True)

    fwd = jax.jit(functools.partial(
        pointnet_sa_module_msg,
        npoint=npoint, radii=radii, nsamples=nsamples, use_xyz=True))

    new_xyz, new_features = fwd(xyz, features, params)
    jax.block_until_ready((new_xyz, new_features))

    assert new_xyz.shape == (B, npoint, 3), new_xyz.shape
    assert new_features.shape == (B, sum(m[-1] for m in mlps), npoint), new_features.shape
    assert bool(jnp.all(jnp.isfinite(new_features)))
    print("KERNEL_OK")
</pallas_src>

<mosaic_0001>
module attributes {stable_mosaic.version = 11 : i64} {
  func.func @kernel(%arg0: i32, %arg1: i32, %arg2: memref<1x8x8x7xbf16, #tpu.memory_space<vmem>>, %arg3: memref<7x8xbf16, #tpu.memory_space<vmem>>, %arg4: memref<1x8xf32, #tpu.memory_space<vmem>>, %arg5: memref<8x128xbf16, #tpu.memory_space<vmem>>, %arg6: memref<1x128xf32, #tpu.memory_space<vmem>>, %arg7: memref<1x128x8xf32, #tpu.memory_space<vmem>>) attributes {dimension_semantics = [#tpu.dimension_semantics<parallel>, #tpu.dimension_semantics<parallel>], iteration_bounds = array<i64: 2, 1>, scalar_prefetch = 0 : i64, scratch_operands = 0 : i64, tpu.core_type = #tpu.core_type<tc>, window_params = [{transform_indices = @transform_0, window_bounds = array<i64: 1, 8, 8, 7>}, {pipeline_mode = #tpu.pipeline_mode<synchronous>, transform_indices = @transform_1, window_bounds = array<i64: 7, 8>}, {pipeline_mode = #tpu.pipeline_mode<synchronous>, transform_indices = @transform_2, window_bounds = array<i64: 1, 8>}, {pipeline_mode = #tpu.pipeline_mode<synchronous>, transform_indices = @transform_3, window_bounds = array<i64: 8, 128>}, {pipeline_mode = #tpu.pipeline_mode<synchronous>, transform_indices = @transform_4, window_bounds = array<i64: 1, 128>}, {transform_indices = @transform_5, window_bounds = array<i64: 1, 128, 8>}]} {
    %c0 = arith.constant 0 : index
    %c0_0 = arith.constant 0 : index
    %c0_1 = arith.constant 0 : index
    %c0_2 = arith.constant 0 : index
    %0 = vector.load %arg2[%c0, %c0_0, %c0_1, %c0_2] : memref<1x8x8x7xbf16, #tpu.memory_space<vmem>>, vector<1x8x8x7xbf16>
    %1 = vector.shape_cast %0 : vector<1x8x8x7xbf16> to vector<8x8x7xbf16>
    %2 = vector.shape_cast %1 : vector<8x8x7xbf16> to vector<64x7xbf16>
    %c0_3 = arith.constant 0 : index
    %c0_4 = arith.constant 0 : index
    %3 = vector.load %arg3[%c0_3, %c0_4] : memref<7x8xbf16, #tpu.memory_space<vmem>>, vector<7x8xbf16>
    %c0_5 = arith.constant 0 : index
    %c0_6 = arith.constant 0 : index
    %4 = vector.load %arg4[%c0_5, %c0_6] : memref<1x8xf32, #tpu.memory_space<vmem>>, vector<1x8xf32>
    %cst = arith.constant dense<0.000000e+00> : vector<64x8xf32>
    %5 = tpu.matmul %2, %3, %cst {dimension_numbers = #tpu.dot_dimension_numbers<[1], [0], [0], [1], [0, 0, 1, 1], [], []>} : vector<64x7xbf16>, vector<7x8xbf16>, vector<64x8xf32> -> vector<64x8xf32>
    %6 = vector.broadcast %4 : vector<1x8xf32> to vector<64x8xf32>
    %7 = arith.addf %5, %6 : vector<64x8xf32>
    %cst_7 = arith.constant 0.000000e+00 : f32
    %8 = vector.broadcast %cst_7 : f32 to vector<64x8xf32>
    %9 = arith.maximumf %7, %8 : vector<64x8xf32>
    %10 = arith.truncf %9 : vector<64x8xf32> to vector<64x8xbf16>
    %c0_8 = arith.constant 0 : index
    %c0_9 = arith.constant 0 : index
    %11 = vector.load %arg5[%c0_8, %c0_9] : memref<8x128xbf16, #tpu.memory_space<vmem>>, vector<8x128xbf16>
    %c0_10 = arith.constant 0 : index
    %c0_11 = arith.constant 0 : index
    %12 = vector.load %arg6[%c0_10, %c0_11] : memref<1x128xf32, #tpu.memory_space<vmem>>, vector<1x128xf32>
    %cst_12 = arith.constant dense<0.000000e+00> : vector<64x128xf32>
    %13 = tpu.matmul %10, %11, %cst_12 {dimension_numbers = #tpu.dot_dimension_numbers<[1], [0], [0], [1], [0, 0, 1, 1], [], []>} : vector<64x8xbf16>, vector<8x128xbf16>, vector<64x128xf32> -> vector<64x128xf32>
    %14 = vector.broadcast %12 : vector<1x128xf32> to vector<64x128xf32>
    %15 = arith.addf %13, %14 : vector<64x128xf32>
    %cst_13 = arith.constant 0.000000e+00 : f32
    %16 = vector.broadcast %cst_13 : f32 to vector<64x128xf32>
    %17 = arith.maximumf %15, %16 : vector<64x128xf32>
    %18 = vector.shape_cast %17 : vector<64x128xf32> to vector<8x8x128xf32>
    %cst_14 = arith.constant dense<0xFF800000> : vector<8x128xf32>
    %19 = vector.multi_reduction <maximumf>, %18, %cst_14 [1] : vector<8x8x128xf32> to vector<8x128xf32>
    %20 = tpu.transpose %19, [1, 0] : vector<8x128xf32> -> vector<128x8xf32>
    %c0_15 = arith.constant 0 : index
    %c0_16 = arith.constant 0 : index
    %c0_17 = arith.constant 0 : index
    %21 = vector.load %arg7[%c0_15, %c0_16, %c0_17] : memref<1x128x8xf32, #tpu.memory_space<vmem>>, vector<1x128x8xf32>
    %22 = vector.shape_cast %21 : vector<1x128x8xf32> to vector<128x8xf32>
    %23 = vector.shape_cast %20 : vector<128x8xf32> to vector<1x128x8xf32>
    tpu.vector_store %arg7[%c0_15, %c0_16, %c0_17], %23 {strides = array<i32>} : memref<1x128x8xf32, #tpu.memory_space<vmem>>, vector<1x128x8xf32>,
    return
  }
  func.func @transform_0(%arg0: i32, %arg1: i32) -> (i32, i32, i32, i32) {
    %c0_i32 = arith.constant 0 : i32
    %c0_i32_0 = arith.constant 0 : i32
    %c0_i32_1 = arith.constant 0 : i32
    return %arg0, %arg1, %c0_i32, %c0_i32_0 : i32, i32, i32, i32
  }
  func.func @transform_1(%arg0: i32, %arg1: i32) -> (i32, i32) {
    %c0_i32 = arith.constant 0 : i32
    %c0_i32_0 = arith.constant 0 : i32
    %c0_i32_1 = arith.constant 0 : i32
    return %c0_i32, %c0_i32_0 : i32, i32
  }
  func.func @transform_2(%arg0: i32, %arg1: i32) -> (i32, i32) {
    %c0_i32 = arith.constant 0 : i32
    %c0_i32_0 = arith.constant 0 : i32
    %c0_i32_1 = arith.constant 0 : i32
    return %c0_i32, %c0_i32_0 : i32, i32
  }
  func.func @transform_3(%arg0: i32, %arg1: i32) -> (i32, i32) {
    %c0_i32 = arith.constant 0 : i32
    %c0_i32_0 = arith.constant 0 : i32
    %c0_i32_1 = arith.constant 0 : i32
    return %c0_i32, %c0_i32_0 : i32, i32
  }
  func.func @transform_4(%arg0: i32, %arg1: i32) -> (i32, i32) {
    %c0_i32 = arith.constant 0 : i32
    %c0_i32_0 = arith.constant 0 : i32
    %c0_i32_1 = arith.constant 0 : i32
    return %c0_i32, %c0_i32_0 : i32, i32
  }
  func.func @transform_5(%arg0: i32, %arg1: i32) -> (i32, i32, i32) {
    %c0_i32 = arith.constant 0 : i32
    %c0_i32_0 = arith.constant 0 : i32
    return %arg0, %c0_i32, %arg1 : i32, i32, i32
  }
}

module attributes {stable_mosaic.version = 11 : i64} {
  func.func @kernel(%arg0: i32, %arg1: i32, %arg2: memref<1x8x16x7xbf16, #tpu.memory_space<vmem>>, %arg3: memref<7x8xbf16, #tpu.memory_space<vmem>>, %arg4: memref<1x8xf32, #tpu.memory_space<vmem>>, %arg5: memref<8x128xbf16, #tpu.memory_space<vmem>>, %arg6: memref<1x128xf32, #tpu.memory_space<vmem>>, %arg7: memref<1x128x8xf32, #tpu.memory_space<vmem>>) attributes {dimension_semantics = [#tpu.dimension_semantics<parallel>, #tpu.dimension_semantics<parallel>], iteration_bounds = array<i64: 2, 1>, scalar_prefetch = 0 : i64, scratch_operands = 0 : i64, tpu.core_type = #tpu.core_type<tc>, window_params = [{transform_indices = @transform_0, window_bounds = array<i64: 1, 8, 16, 7>}, {pipeline_mode = #tpu.pipeline_mode<synchronous>, transform_indices = @transform_1, window_bounds = array<i64: 7, 8>}, {pipeline_mode = #tpu.pipeline_mode<synchronous>, transform_indices = @transform_2, window_bounds = array<i64: 1, 8>}, {pipeline_mode = #tpu.pipeline_mode<synchronous>, transform_indices = @transform_3, window_bounds = array<i64: 8, 128>}, {pipeline_mode = #tpu.pipeline_mode<synchronous>, transform_indices = @transform_4, window_bounds = array<i64: 1, 128>}, {transform_indices = @transform_5, window_bounds = array<i64: 1, 128, 8>}]} {
    %c0 = arith.constant 0 : index
    %c0_0 = arith.constant 0 : index
    %c0_1 = arith.constant 0 : index
    %c0_2 = arith.constant 0 : index
    %0 = vector.load %arg2[%c0, %c0_0, %c0_1, %c0_2] : memref<1x8x16x7xbf16, #tpu.memory_space<vmem>>, vector<1x8x16x7xbf16>
    %1 = vector.shape_cast %0 : vector<1x8x16x7xbf16> to vector<8x16x7xbf16>
    %2 = vector.shape_cast %1 : vector<8x16x7xbf16> to vector<128x7xbf16>
    %c0_3 = arith.constant 0 : index
    %c0_4 = arith.constant 0 : index
    %3 = vector.load %arg3[%c0_3, %c0_4] : memref<7x8xbf16, #tpu.memory_space<vmem>>, vector<7x8xbf16>
    %c0_5 = arith.constant 0 : index
    %c0_6 = arith.constant 0 : index
    %4 = vector.load %arg4[%c0_5, %c0_6] : memref<1x8xf32, #tpu.memory_space<vmem>>, vector<1x8xf32>
    %cst = arith.constant dense<0.000000e+00> : vector<128x8xf32>
    %5 = tpu.matmul %2, %3, %cst {dimension_numbers = #tpu.dot_dimension_numbers<[1], [0], [0], [1], [0, 0, 1, 1], [], []>} : vector<128x7xbf16>, vector<7x8xbf16>, vector<128x8xf32> -> vector<128x8xf32>
    %6 = vector.broadcast %4 : vector<1x8xf32> to vector<128x8xf32>
    %7 = arith.addf %5, %6 : vector<128x8xf32>
    %cst_7 = arith.constant 0.000000e+00 : f32
    %8 = vector.broadcast %cst_7 : f32 to vector<128x8xf32>
    %9 = arith.maximumf %7, %8 : vector<128x8xf32>
    %10 = arith.truncf %9 : vector<128x8xf32> to vector<128x8xbf16>
    %c0_8 = arith.constant 0 : index
    %c0_9 = arith.constant 0 : index
    %11 = vector.load %arg5[%c0_8, %c0_9] : memref<8x128xbf16, #tpu.memory_space<vmem>>, vector<8x128xbf16>
    %c0_10 = arith.constant 0 : index
    %c0_11 = arith.constant 0 : index
    %12 = vector.load %arg6[%c0_10, %c0_11] : memref<1x128xf32, #tpu.memory_space<vmem>>, vector<1x128xf32>
    %cst_12 = arith.constant dense<0.000000e+00> : vector<128x128xf32>
    %13 = tpu.matmul %10, %11, %cst_12 {dimension_numbers = #tpu.dot_dimension_numbers<[1], [0], [0], [1], [0, 0, 1, 1], [], []>} : vector<128x8xbf16>, vector<8x128xbf16>, vector<128x128xf32> -> vector<128x128xf32>
    %14 = vector.broadcast %12 : vector<1x128xf32> to vector<128x128xf32>
    %15 = arith.addf %13, %14 : vector<128x128xf32>
    %cst_13 = arith.constant 0.000000e+00 : f32
    %16 = vector.broadcast %cst_13 : f32 to vector<128x128xf32>
    %17 = arith.maximumf %15, %16 : vector<128x128xf32>
    %18 = vector.shape_cast %17 : vector<128x128xf32> to vector<8x16x128xf32>
    %cst_14 = arith.constant dense<0xFF800000> : vector<8x128xf32>
    %19 = vector.multi_reduction <maximumf>, %18, %cst_14 [1] : vector<8x16x128xf32> to vector<8x128xf32>
    %20 = tpu.transpose %19, [1, 0] : vector<8x128xf32> -> vector<128x8xf32>
    %c0_15 = arith.constant 0 : index
    %c0_16 = arith.constant 0 : index
    %c0_17 = arith.constant 0 : index
    %21 = vector.load %arg7[%c0_15, %c0_16, %c0_17] : memref<1x128x8xf32, #tpu.memory_space<vmem>>, vector<1x128x8xf32>
    %22 = vector.shape_cast %21 : vector<1x128x8xf32> to vector<128x8xf32>
    %23 = vector.shape_cast %20 : vector<128x8xf32> to vector<1x128x8xf32>
    tpu.vector_store %arg7[%c0_15, %c0_16, %c0_17], %23 {strides = array<i32>} : memref<1x128x8xf32, #tpu.memory_space<vmem>>, vector<1x128x8xf32>,
    return
  }
  func.func @transform_0(%arg0: i32, %arg1: i32) -> (i32, i32, i32, i32) {
    %c0_i32 = arith.constant 0 : i32
    %c0_i32_0 = arith.constant 0 : i32
    %c0_i32_1 = arith.constant 0 : i32
    return %arg0, %arg1, %c0_i32, %c0_i32_0 : i32, i32, i32, i32
  }
  func.func @transform_1(%arg0: i32, %arg1: i32) -> (i32, i32) {
    %c0_i32 = arith.constant 0 : i32
    %c0_i32_0 = arith.constant 0 : i32
    %c0_i32_1 = arith.constant 0 : i32
    return %c0_i32, %c0_i32_0 : i32, i32
  }
  func.func @transform_2(%arg0: i32, %arg1: i32) -> (i32, i32) {
    %c0_i32 = arith.constant 0 : i32
    %c0_i32_0 = arith.constant 0 : i32
    %c0_i32_1 = arith.constant 0 : i32
    return %c0_i32, %c0_i32_0 : i32, i32
  }
  func.func @transform_3(%arg0: i32, %arg1: i32) -> (i32, i32) {
    %c0_i32 = arith.constant 0 : i32
    %c0_i32_0 = arith.constant 0 : i32
    %c0_i32_1 = arith.constant 0 : i32
    return %c0_i32, %c0_i32_0 : i32, i32
  }
  func.func @transform_4(%arg0: i32, %arg1: i32) -> (i32, i32) {
    %c0_i32 = arith.constant 0 : i32
    %c0_i32_0 = arith.constant 0 : i32
    %c0_i32_1 = arith.constant 0 : i32
    return %c0_i32, %c0_i32_0 : i32, i32
  }
  func.func @transform_5(%arg0: i32, %arg1: i32) -> (i32, i32, i32) {
    %c0_i32 = arith.constant 0 : i32
    %c0_i32_0 = arith.constant 0 : i32
    return %arg0, %c0_i32, %arg1 : i32, i32, i32
  }
}

</mosaic_0001>

<llo_original>
// kernel: custom-call.12
$region0: #{custom-call.12}
  %s0 = inlined_call_operand.vmem [shape: f32[2,16], index: 0, kind: output, shape index: {}]

// kernel: neg.7
$region0: #{neg.7}
  #allocation0 [shape = 's32[1]{0}', space=sflag, size = 0x4, scoped, tag = 'scoped memory for neg.7']
  %s0 = inlined_call_operand.vmem [shape: s32[2,8,16], index: 0, kind: input, shape index: {}]
  %s1 = inlined_call_operand.vmem [shape: s32[2,8,16], index: 1, kind: output, shape index: {}]
  %v2 = vld [vmem:[%s0] sm:$0xff]
  %3 = xla_tuple %v2
  %4 = xla_tuple %3
  %v5 = vsub.s32 0, %v2
  %6 = xla_tuple %v5
  %7 = vst [vmem:[%s1] sm:$0xff] %v5
  %s8 = scalar_lea.vmem %s0, 8
  %v9 = vld [vmem:[%s8] sm:$0xff]
  %10 = xla_tuple %v9
  %11 = xla_tuple %10
  %v12 = vsub.s32 0, %v9
  %13 = xla_tuple %v12
  %s14 = scalar_lea.vmem %s1, 8
  %15 = vst [vmem:[%s14] sm:$0xff] %v12

// kernel: pointnet_sa_module_msg.2
$region0: #{pointnet_sa_module_msg.2}
  #allocation0 [shape = 'u32[]', space=smem, size = 0x4, offset = 0x4, fixed_abs, tag = 'smem constant byte address 0x4 - core index']
  #allocation1 [shape = 'u32[144,128]{1,0:T(1,128)}', space=vmem, size = 0x12000, scoped, tag = 'internal scratch']
  %s0 = inlined_call_operand.vmem [shape: bf16[2,8,8,7], index: 0, kind: input, shape index: {}]
  %s1 = inlined_call_operand.vmem [shape: bf16[7,8], index: 1, kind: input, shape index: {}]
  %s2 = inlined_call_operand.vmem [shape: f32[1,8], index: 2, kind: input, shape index: {}]
  %s3 = inlined_call_operand.vmem [shape: bf16[8,128], index: 3, kind: input, shape index: {}]
  %s4 = inlined_call_operand.vmem [shape: f32[1,128], index: 4, kind: input, shape index: {}]
  %s5 = inlined_call_operand.vmem [shape: f32[2,128,8], index: 5, kind: output, shape index: {}]
  %s6 = sld [smem:[#allocation0]]
  $region53: #{pointnet_sa_module_msg.2} parent=0
    _
  %s8 = ssub.s32 1, %s6
  %s9 = scalar_select 0, %s8, %s6
  loop: start=0, step=1, limit=4
  $region2: #{pointnet_sa_module_msg.2} parent=0 // loop_pre_header
    _
  $region3: #{pointnet_sa_module_msg.2} parent=0 // loop_header
    %s11 = sphi 0, %s15
    %p12 = scmp.ge.s32.totalorder %s11, 4
    %s18 = sphi 0, %s30
    %s19 = sphi 0, %s26
    %s20 = sphi 0, %s18
    %s21 = sphi 0, %s19
    %s22 = sphi 0, %s20
    %s23 = sphi 0, %s21
    %s35 = sphi 0, %s37
    %s38 = sphi 0, %s35
    %s39 = sphi 0, %s38
    %s55 = sphi 0, %s39
    %s59 = sphi 0, %s59
    %s61 = sphi 0, %s59
    %s62 = sphi 0, %s61
    %s76 = sphi 0, %s62
    %s80 = sphi 0, %s80
    %s82 = sphi 0, %s80
    %s83 = sphi 0, %s82
    %s97 = sphi 0, %s83
    %s101 = sphi 0, %s101
    %s103 = sphi 0, %s101
    %s104 = sphi 0, %s103
    %s118 = sphi 0, %s104
    %s122 = sphi 0, %s122
    %s124 = sphi 0, %s122
    %s125 = sphi 0, %s124
    %s139 = sphi 0, %s125
    %s147 = sphi 0, %s149
    %s150 = sphi 0, %s147
    %s151 = sphi 0, %s150
    %s167 = sphi 0, %s151
  $region4: #{pointnet_sa_module_msg.2} parent=0 // loop_header_branch
    %14 = sbr.rel (%p12) target = $region8
  $region5: #{pointnet_sa_module_msg.2} parent=0 // loop_body
    %s16 = ssub.s32 %s11, 1
    %s17 = ssub.s32 %s11, 2
    %s24 = sadd.s32 1, %s19
    %p25 = scmp.ge.s32.totalorder %s24, 1
    %s26 = scalar_select %p25, 0, %s24
    %s27 = sadd.s32 1, %s18
    %s28 = scalar_select %p25, %s27, %s18
    %p29 = scmp.ge.s32.totalorder %s28, 2
    %s30 = scalar_select %p29, 0, %s28
    %s31 = ssub.s32 %s18, %s30
    %s32 = ssub.s32 %s19, %s26
    %s33 = sor.u32 %s31, %s32
    %p34 = scmp.eq.s32.totalorder %s33, 0
    %s36 = sadd.s32 %s35, 1
    %s37 = scalar_select %p34, %s35, %s36
    %p40 = pneg %p34
    %p41 = scmp.eq.s32.totalorder %s11, 1
    %p42 = por %p40, %p41
    %p43 = scmp.ne.s32.totalorder %s35, %s38
    %p44 = scmp.eq.s32.totalorder %s11, 0
    %p45 = por %p43, %p44
    %p46 = scmp.ne.s32.totalorder %s35, %s38
    %p47 = scmp.eq.s32.totalorder %s16, 1
    %p48 = por %p46, %p47
    %p49 = scmp.ne.s32.totalorder %s38, %s39
    %p50 = scmp.eq.s32.totalorder %s16, 0
    %p51 = por %p49, %p50
    %p52 = scmp.ne.s32.totalorder %s38, %s39
    %p53 = scmp.eq.s32.totalorder %s17, 1
    %p54 = por %p52, %p53
    %p56 = scmp.ne.s32.totalorder %s39, %s55
    %p57 = scmp.eq.s32.totalorder %s17, 0
    %p58 = por %p56, %p57
    %s60 = sadd.s32 %s59, 1
    %p63 = scmp.eq.s32.totalorder %s11, 1
    %p64 = scmp.ne.s32.totalorder %s59, %s61
    %p65 = scmp.eq.s32.totalorder %s11, 0
    %p66 = por %p64, %p65
    %p67 = scmp.ne.s32.totalorder %s59, %s61
    %p68 = scmp.eq.s32.totalorder %s16, 1
    %p69 = por %p67, %p68
    %p70 = scmp.ne.s32.totalorder %s61, %s62
    %p71 = scmp.eq.s32.totalorder %s16, 0
    %p72 = por %p70, %p71
    %p73 = scmp.ne.s32.totalorder %s61, %s62
    %p74 = scmp.eq.s32.totalorder %s17, 1
    %p75 = por %p73, %p74
    %p77 = scmp.ne.s32.totalorder %s62, %s76
    %p78 = scmp.eq.s32.totalorder %s17, 0
    %p79 = por %p77, %p78
    %s81 = sadd.s32 %s80, 1
    %p84 = scmp.eq.s32.totalorder %s11, 1
    %p85 = scmp.ne.s32.totalorder %s80, %s82
    %p86 = scmp.eq.s32.totalorder %s11, 0
    %p87 = por %p85, %p86
    %p88 = scmp.ne.s32.totalorder %s80, %s82
    %p89 = scmp.eq.s32.totalorder %s16, 1
    %p90 = por %p88, %p89
    %p91 = scmp.ne.s32.totalorder %s82, %s83
    %p92 = scmp.eq.s32.totalorder %s16, 0
    %p93 = por %p91, %p92
    %p94 = scmp.ne.s32.totalorder %s82, %s83
    %p95 = scmp.eq.s32.totalorder %s17, 1
    %p96 = por %p94, %p95
    %p98 = scmp.ne.s32.totalorder %s83, %s97
    %p99 = scmp.eq.s32.totalorder %s17, 0
    %p100 = por %p98, %p99
    %s102 = sadd.s32 %s101, 1
    %p105 = scmp.eq.s32.totalorder %s11, 1
    %p106 = scmp.ne.s32.totalorder %s101, %s103
    %p107 = scmp.eq.s32.totalorder %s11, 0
    %p108 = por %p106, %p107
    %p109 = scmp.ne.s32.totalorder %s101, %s103
    %p110 = scmp.eq.s32.totalorder %s16, 1
    %p111 = por %p109, %p110
    %p112 = scmp.ne.s32.totalorder %s103, %s104
    %p113 = scmp.eq.s32.totalorder %s16, 0
    %p114 = por %p112, %p113
    %p115 = scmp.ne.s32.totalorder %s103, %s104
    %p116 = scmp.eq.s32.totalorder %s17, 1
    %p117 = por %p115, %p116
    %p119 = scmp.ne.s32.totalorder %s104, %s118
    %p120 = scmp.eq.s32.totalorder %s17, 0
    %p121 = por %p119, %p120
    %s123 = sadd.s32 %s122, 1
    %p126 = scmp.eq.s32.totalorder %s11, 1
    %p127 = scmp.ne.s32.totalorder %s122, %s124
    %p128 = scmp.eq.s32.totalorder %s11, 0
    %p129 = por %p127, %p128
    %p130 = scmp.ne.s32.totalorder %s122, %s124
    %p131 = scmp.eq.s32.totalorder %s16, 1
    %p132 = por %p130, %p131
    %p133 = scmp.ne.s32.totalorder %s124, %s125
    %p134 = scmp.eq.s32.totalorder %s16, 0
    %p135 = por %p133, %p134
    %p136 = scmp.ne.s32.totalorder %s124, %s125
    %p137 = scmp.eq.s32.totalorder %s17, 1
    %p138 = por %p136, %p137
    %p140 = scmp.ne.s32.totalorder %s125, %s139
    %p141 = scmp.eq.s32.totalorder %s17, 0
    %p142 = por %p140, %p141
    %s143 = ssub.s32 %s18, %s30
    %s144 = ssub.s32 %s19, %s26
    %s145 = sor.u32 %s143, %s144
    %p146 = scmp.eq.s32.totalorder %s145, 0
    %s148 = sadd.s32 %s147, 1
    %s149 = scalar_select %p146, %s147, %s148
    %p152 = pneg %p146
    %p153 = scmp.eq.s32.totalorder %s11, 1
    %p154 = por %p152, %p153
    %p155 = scmp.ne.s32.totalorder %s147, %s150
    %p156 = scmp.eq.s32.totalorder %s11, 0
    %p157 = por %p155, %p156
    %p158 = scmp.ne.s32.totalorder %s147, %s150
    %p159 = scmp.eq.s32.totalorder %s16, 1
    %p160 = por %p158, %p159
    %p161 = scmp.ne.s32.totalorder %s150, %s151
    %p162 = scmp.eq.s32.totalorder %s16, 0
    %p163 = por %p161, %p162
    %p164 = scmp.ne.s32.totalorder %s150, %s151
    %p165 = scmp.eq.s32.totalorder %s17, 1
    %p166 = por %p164, %p165
    %p168 = scmp.ne.s32.totalorder %s151, %s167
    %p169 = scmp.eq.s32.totalorder %s17, 0
    %p170 = por %p168, %p169
    %p171 = scmp.le.s32.totalorder 1, %s11
    %p172 = scmp.lt.s32.totalorder %s11, 3
    %p173 = pnand %p171, %p172
    %p174 = pneg %p173
    // Predicated region
    $region9: #{pointnet_sa_module_msg.2} parent=5 // pred_check
      _
    $region10: #{pointnet_sa_module_msg.2} parent=5 // pred_check_branch
      %176 = sbr.rel (%p173) target = $region12
    $region11: #{pointnet_sa_module_msg.2} parent=5 // pred_region
      %s177 = ssub.s32 %s11, 1
      // Predicated region
      $region13: #{pointnet_sa_module_msg.2} parent=11 // pred_check
        %p178 = pneg %p72
      $region14: #{pointnet_sa_module_msg.2} parent=11 // pred_check_branch
        %180 = sbr.rel (%p178) target = $region16
      $region15: #{pointnet_sa_module_msg.2} parent=11 // pred_region
        _
      $region16: #{pointnet_sa_module_msg.2} parent=11 // pred_fallthru
        _
      // Predicated region
      $region17: #{pointnet_sa_module_msg.2} parent=11 // pred_check
        %p181 = pneg %p93
      $region18: #{pointnet_sa_module_msg.2} parent=11 // pred_check_branch
        %183 = sbr.rel (%p181) target = $region20
      $region19: #{pointnet_sa_module_msg.2} parent=11 // pred_region
        _
      $region20: #{pointnet_sa_module_msg.2} parent=11 // pred_fallthru
        _
      // Predicated region
      $region21: #{pointnet_sa_module_msg.2} parent=11 // pred_check
        %p184 = pneg %p114
      $region22: #{pointnet_sa_module_msg.2} parent=11 // pred_check_branch
        %186 = sbr.rel (%p184) target = $region24
      $region23: #{pointnet_sa_module_msg.2} parent=11 // pred_region
        _
      $region24: #{pointnet_sa_module_msg.2} parent=11 // pred_fallthru
        _
      // Predicated region
      $region25: #{pointnet_sa_module_msg.2} parent=11 // pred_check
        %p187 = pneg %p135
      $region26: #{pointnet_sa_module_msg.2} parent=11 // pred_check_branch
        %189 = sbr.rel (%p187) target = $region28
      $region27: #{pointnet_sa_module_msg.2} parent=11 // pred_region
        _
      $region28: #{pointnet_sa_module_msg.2} parent=11 // pred_fallthru
        _
    $region12: #{pointnet_sa_module_msg.2} parent=5 // pred_fallthru
      _
    %p190 = scmp.lt.s32.totalorder %s11, 2
    // Predicated region
    $region29: #{pointnet_sa_module_msg.2} parent=5 // pred_check
      %p191 = pneg %p190
    $region30: #{pointnet_sa_module_msg.2} parent=5 // pred_check_branch
      %193 = sbr.rel (%p191) target = $region32
    $region31: #{pointnet_sa_module_msg.2} parent=5 // pred_region
      // Predicated region
      $region33: #{pointnet_sa_module_msg.2} parent=31 // pred_check
        %p194 = pneg %p45
      $region34: #{pointnet_sa_module_msg.2} parent=31 // pred_check_branch
        %196 = sbr.rel (%p194) target = $region36
      $region35: #{pointnet_sa_module_msg.2} parent=31 // pred_region
        %s197 = smul.u32 8, %s19
        %p198 = scmp.lt.s32.totalorder %s18, 1
        %s199 = scalar_select %p198, %s18, 1
        %p200 = scmp.lt.s32.totalorder %s197, 7
        %s201 = scalar_select %p200, %s197, 7
        %s202 = smul.addr %s199, 8
        %s203 = sadd.s32 %s201, %s202
        %s204 = smul.addr %s203, 4
        %s205 = scalar_lea.vmem %s0, %s204
        %s206 = smul.u32 8, %s19
      $region36: #{pointnet_sa_module_msg.2} parent=31 // pred_fallthru
        _
    $region32: #{pointnet_sa_module_msg.2} parent=5 // pred_fallthru
      _
    %p207 = scmp.le.s32.totalorder 1, %s11
    %p208 = scmp.lt.s32.totalorder %s11, 3
    %p209 = pnand %p207, %p208
    %p210 = pneg %p209
    // Predicated region
    $region37: #{pointnet_sa_module_msg.2} parent=5 // pred_check
      _
    $region38: #{pointnet_sa_module_msg.2} parent=5 // pred_check_branch
      %212 = sbr.rel (%p209) target = $region40
    $region39: #{pointnet_sa_module_msg.2} parent=5 // pred_region
      %s213 = ssub.s32 %s11, 1
      %s214 = smul.u32 8, %s21
      %p215 = scmp.lt.s32.totalorder %s20, 1
      %s216 = scalar_select %p215, %s20, 1
      %p217 = scmp.lt.s32.totalorder %s214, 7
      %s218 = scalar_select %p217, %s214, 7
      %s219 = smul.addr %s216, 8
      %s220 = sadd.s32 %s218, %s219
      %s221 = smul.addr %s220, 4
      %s222 = scalar_lea.vmem %s0, %s221
      %p223 = pneg %p51
      %p224 = pneg %p48
      %p225 = pneg %p72
      %p226 = pneg %p69
      %p227 = pneg %p93
      %p228 = pneg %p90
      %p229 = pneg %p114
      %p230 = pneg %p111
      %p231 = pneg %p135
      %p232 = pneg %p132
      %p233 = pneg %p163
      %p234 = pneg %p160
      %p235 = scmp.lt.s32.totalorder %s20, 1
      %s236 = scalar_select %p235, %s20, 1
      %p237 = scmp.lt.s32.totalorder %s21, 0
      %s238 = scalar_select %p237, %s21, 0
      %s239 = smul.addr %s236, 16
      %s240 = sadd.s32 %s238, %s239
      %s241 = smul.addr %s240, 8
      %s242 = scalar_lea.vmem %s5, %s241
      %s243 = smul.u32 8, %s21
      %p244 = scmp.lt.s32.totalorder %s20, 1
      %s245 = scalar_select %p244, %s20, 1
      %p246 = scmp.lt.s32.totalorder %s243, 7
      %s247 = scalar_select %p246, %s243, 7
      %s248 = smul.addr %s245, 8
      %s249 = sadd.s32 %s247, %s248
      %s250 = smul.addr %s249, 4
      %s251 = scalar_lea.vmem %s0, %s250
      %s252 = smul.u32 8, %s21
      %p253 = scmp.lt.s32.totalorder %s20, 1
      %s254 = scalar_select %p253, %s20, 1
      %p255 = scmp.lt.s32.totalorder %s21, 0
      %s256 = scalar_select %p255, %s21, 0
      %s257 = smul.addr %s254, 16
      %s258 = sadd.s32 %s256, %s257
      %s259 = smul.addr %s258, 8
      %s260 = scalar_lea.vmem %s5, %s259
      %v262 = vld [vmem:[%s251] sm:$0xf]
      %v263 = vld [vmem:[%s251 + $0x4] sm:$0xf]
      %v264 = vld [vmem:[%s251 + $0x8] sm:$0xf]
      %v265 = vld [vmem:[%s251 + $0xc] sm:$0xf]
      %v266 = vld [vmem:[%s251 + $0x10] sm:$0xf]
      %v267 = vld [vmem:[%s251 + $0x14] sm:$0xf]
      %v268 = vld [vmem:[%s251 + $0x18] sm:$0xf]
      %v269 = vld [vmem:[%s251 + $0x1c] sm:$0xf]
      %v270 = vld [vmem:[%s1] sm:$0xf]
      %v271 = vld [vmem:[%s2] sm:$0x1]
      %v273 = vlaneseq
      %v274 = vshrl.u32 %v273, 7
      %v275 = vsub.s32 0, %v274
      %v276 = vrot.slane %v271, %v275
      %v286 = vunpack.c.l.b16 %v262
      %v287 = vunpack.c.l.b16 %v263
      %v288 = vunpack.c.l.b16 %v264
      %v289 = vunpack.c.l.b16 %v265
      %v290 = vunpack.c.l.b16 %v266
      %v291 = vunpack.c.l.b16 %v267
      %v292 = vunpack.c.l.b16 %v268
      %v293 = vunpack.c.l.b16 %v269
      %v294 = vpack.c.b16 %v287, %v286
      %v295 = vpack.c.b16 %v289, %v288
      %v296 = vpack.c.b16 %v291, %v290
      %v297 = vpack.c.b16 %v293, %v292
      %vm298 = vcmask 56320
      %v300 = vsel %vm298, %v294, 0
      %v303 = vsel %vm298, %v295, 0
      %v306 = vsel %vm298, %v296, 0
      %v309 = vsel %vm298, %v297, 0
      %vm311 = vcmask 1042432
      %vm312 = vcmask 1043456
      %v313 = vsel %vm311, 4294967295, 65535
      %v314 = vsel %vm312, %v313, 0
      %v316 = vand.u32 %v270, %v314
      %318 = vmatprep.subr.bf16.mxu0 0
      %319 = vmatpush1.bf16.msra.mxu0 %v316
      %320 = vmatprep.subr.bf16.mxu0 0
      %321 = vmatpush1.bf16.msra.mxu0 0
      %322 = vmatprep.subr.bf16.mxu0 0
      %323 = vmatpush1.bf16.msra.mxu0 0
      %324 = vmatprep.subr.bf16.mxu0 0
      %325 = vmatpush1.bf16.msra.mxu0 0
      %326 = vmatprep.subr.bf16.mxu0 0
      %327 = vmatpush1.bf16.msra.mxu0 0
      %328 = vmatprep.subr.bf16.mxu0 0
      %329 = vmatpush1.bf16.msra.mxu0 0
      %330 = vmatprep.subr.bf16.mxu0 0
      %331 = vmatpush1.bf16.msra.mxu0 0
      %332 = vmatprep.subr.bf16.mxu0 0
      %333 = vmatpush1.bf16.msra.mxu0 0
      %334 = vmatprep.subr.bf16.mxu0 0
      %335 = vmatpush1.bf16.msra.mxu0 0
      %336 = vmatprep.subr.bf16.mxu0 0
      %337 = vmatpush1.bf16.msra.mxu0 0
      %338 = vmatprep.subr.bf16.mxu0 0
      %339 = vmatpush1.bf16.msra.mxu0 0
      %340 = vmatprep.subr.bf16.mxu0 0
      %341 = vmatpush1.bf16.msra.mxu0 0
      %342 = vmatprep.subr.bf16.mxu0 0
      %343 = vmatpush1.bf16.msra.mxu0 0
      %344 = vmatprep.subr.bf16.mxu0 0
      %345 = vmatpush1.bf16.msra.mxu0 0
      %346 = vmatprep.subr.bf16.mxu0 0
      %347 = vmatpush1.bf16.msra.mxu0 0
      %348 = vmatprep.subr.bf16.mxu0 0
      %349 = vmatpush1.bf16.msra.mxu0 0
      %350 = vmatprep.mubr.bf16.mxu0 0
      %351 = vmatmul.mubr.bf16.gmra.mrb[0].mxu0 %v300
      %v352 = vpop.f32.mrb[0].mxu0
      %v353 = vadd.f32 %v276, %v352
      %v354 = vpop.f32.mrb[0].mxu0
      %v355 = vpop.f32.mrb[0].mxu0
      %v356 = vadd.f32 %v276, %v355
      %v357 = vpop.f32.mrb[0].mxu0
      %358 = vmatprep.mubr.bf16.mxu0 0
      %359 = vmatmul.mubr.bf16.gmra.mrb[0].mxu0 %v303
      %v360 = vpop.f32.mrb[0].mxu0
      %v361 = vadd.f32 %v276, %v360
      %v362 = vpop.f32.mrb[0].mxu0
      %v363 = vpop.f32.mrb[0].mxu0
      %v364 = vadd.f32 %v276, %v363
      %v365 = vpop.f32.mrb[0].mxu0
      %366 = vmatprep.mubr.bf16.mxu0 0
      %367 = vmatmul.mubr.bf16.gmra.mrb[0].mxu0 %v306
      %v368 = vpop.f32.mrb[0].mxu0
      %v369 = vadd.f32 %v276, %v368
      %v370 = vpop.f32.mrb[0].mxu0
      %v371 = vpop.f32.mrb[0].mxu0
      %v372 = vadd.f32 %v276, %v371
      %v373 = vpop.f32.mrb[0].mxu0
      %374 = vmatprep.mubr.bf16.mxu0 0
      %375 = vmatmul.mubr.bf16.gmra.mrb[0].mxu0 %v309
      %v376 = vpop.f32.mrb[0].mxu0
      %v377 = vadd.f32 %v276, %v376
      %v378 = vpop.f32.mrb[0].mxu0
      %v379 = vpop.f32.mrb[0].mxu0
      %v380 = vadd.f32 %v276, %v379
      %v381 = vpop.f32.mrb[0].mxu0
      %382 = vdwg.mxu0
      %v383 = vmax.f32 %v353, 0.0
      %v384 = vmax.f32 %v356, 0.0
      %v385 = vmax.f32 %v361, 0.0
      %v386 = vmax.f32 %v364, 0.0
      %v387 = vmax.f32 %v369, 0.0
      %v388 = vmax.f32 %v372, 0.0
      %v389 = vmax.f32 %v377, 0.0
      %v390 = vmax.f32 %v380, 0.0
      %v391 = vpack.c.bf16 %v384, %v383
      %v392 = vpack.c.bf16 %v386, %v385
      %v393 = vpack.c.bf16 %v388, %v387
      %v394 = vpack.c.bf16 %v390, %v389
      %v395 = vld [vmem:[%s3] sm:$0xf]
      %v396 = vld [vmem:[%s4] sm:$0x1]
      %v398 = vlaneseq
      %v399 = vshrl.u32 %v398, 7
      %v400 = vsub.s32 0, %v399
      %v401 = vrot.slane %v396, %v400
      %vm403 = vcmask 64512
      %v405 = vsel %vm403, %v391, 0
      %v408 = vsel %vm403, %v392, 0
      %v411 = vsel %vm403, %v393, 0
      %v414 = vsel %vm403, %v394, 0
      %v417 = vsel %vm312, %v395, 0
      %419 = vmatprep.subr.bf16.mxu0 0
      %420 = vmatpush1.bf16.msra.mxu0 %v417
      %421 = vmatprep.subr.bf16.mxu0 0
      %422 = vmatpush1.bf16.msra.mxu0 0
      %423 = vmatprep.subr.bf16.mxu0 0
      %424 = vmatpush1.bf16.msra.mxu0 0
      %425 = vmatprep.subr.bf16.mxu0 0
      %426 = vmatpush1.bf16.msra.mxu0 0
      %427 = vmatprep.subr.bf16.mxu0 0
      %428 = vmatpush1.bf16.msra.mxu0 0
      %429 = vmatprep.subr.bf16.mxu0 0
      %430 = vmatpush1.bf16.msra.mxu0 0
      %431 = vmatprep.subr.bf16.mxu0 0
      %432 = vmatpush1.bf16.msra.mxu0 0
      %433 = vmatprep.subr.bf16.mxu0 0
      %434 = vmatpush1.bf16.msra.mxu0 0
      %435 = vmatprep.subr.bf16.mxu0 0
      %436 = vmatpush1.bf16.msra.mxu0 0
      %437 = vmatprep.subr.bf16.mxu0 0
      %438 = vmatpush1.bf16.msra.mxu0 0
      %439 = vmatprep.subr.bf16.mxu0 0
      %440 = vmatpush1.bf16.msra.mxu0 0
      %441 = vmatprep.subr.bf16.mxu0 0
      %442 = vmatpush1.bf16.msra.mxu0 0
      %443 = vmatprep.subr.bf16.mxu0 0
      %444 = vmatpush1.bf16.msra.mxu0 0
      %445 = vmatprep.subr.bf16.mxu0 0
      %446 = vmatpush1.bf16.msra.mxu0 0
      %447 = vmatprep.subr.bf16.mxu0 0
      %448 = vmatpush1.bf16.msra.mxu0 0
      %449 = vmatprep.subr.bf16.mxu0 0
      %450 = vmatpush1.bf16.msra.mxu0 0
      %451 = vmatprep.mubr.bf16.mxu0 0
      %452 = vmatmul.mubr.bf16.gmra.mrb[0].mxu0 %v405
      %v453 = vpop.f32.mrb[0].mxu0
      %v454 = vadd.f32 %v401, %v453
      %v455 = vpop.f32.mrb[0].mxu0
      %v456 = vpop.f32.mrb[0].mxu0
      %v457 = vadd.f32 %v401, %v456
      %v458 = vpop.f32.mrb[0].mxu0
      %459 = vmatprep.mubr.bf16.mxu0 0
      %460 = vmatmul.mubr.bf16.gmra.mrb[0].mxu0 %v408
      %v461 = vpop.f32.mrb[0].mxu0
      %v462 = vadd.f32 %v401, %v461
      %v463 = vpop.f32.mrb[0].mxu0
      %v464 = vpop.f32.mrb[0].mxu0
      %v465 = vadd.f32 %v401, %v464
      %v466 = vpop.f32.mrb[0].mxu0
      %467 = vmatprep.mubr.bf16.mxu0 0
      %468 = vmatmul.mubr.bf16.gmra.mrb[0].mxu0 %v411
      %v469 = vpop.f32.mrb[0].mxu0
      %v470 = vadd.f32 %v401, %v469
      %v471 = vpop.f32.mrb[0].mxu0
      %v472 = vpop.f32.mrb[0].mxu0
      %v473 = vadd.f32 %v401, %v472
      %v474 = vpop.f32.mrb[0].mxu0
      %475 = vmatprep.mubr.bf16.mxu0 0
      %476 = vmatmul.mubr.bf16.gmra.mrb[0].mxu0 %v414
      %v477 = vpop.f32.mrb[0].mxu0
      %v478 = vadd.f32 %v401, %v477
      %v479 = vpop.f32.mrb[0].mxu0
      %v480 = vpop.f32.mrb[0].mxu0
      %v481 = vadd.f32 %v401, %v480
      %v482 = vpop.f32.mrb[0].mxu0
      %483 = vdwg.mxu0
      %v484 = vmax.f32 %v454, 0.0
      %v485 = vmax.f32 %v457, 0.0
      %v486 = vmax.f32 %v462, 0.0
      %v487 = vmax.f32 %v465, 0.0
      %v488 = vmax.f32 %v470, 0.0
      %v489 = vmax.f32 %v473, 0.0
      %v490 = vmax.f32 %v478, 0.0
      %v491 = vmax.f32 %v481, 0.0
      %v492 = vrot.slane %v484, 4
      %v493 = vmax.f32 %v484, %v492
      %v494 = vrot.slane %v493, 2
      %v495 = vmax.f32 %v493, %v494
      %v496 = vrot.slane %v495, 1
      %v497 = vmax.f32 %v495, %v496
      %v498 = vrot.slane %v485, 4
      %v499 = vmax.f32 %v485, %v498
      %v500 = vrot.slane %v499, 2
      %v501 = vmax.f32 %v499, %v500
      %v502 = vrot.slane %v501, 1
      %v503 = vmax.f32 %v501, %v502
      %v504 = vrot.slane %v486, 4
      %v505 = vmax.f32 %v486, %v504
      %v506 = vrot.slane %v505, 2
      %v507 = vmax.f32 %v505, %v506
      %v508 = vrot.slane %v507, 1
      %v509 = vmax.f32 %v507, %v508
      %v510 = vrot.slane %v487, 4
      %v511 = vmax.f32 %v487, %v510
      %v512 = vrot.slane %v511, 2
      %v513 = vmax.f32 %v511, %v512
      %v514 = vrot.slane %v513, 1
      %v515 = vmax.f32 %v513, %v514
      %v516 = vrot.slane %v488, 4
      %v517 = vmax.f32 %v488, %v516
      %v518 = vrot.slane %v517, 2
      %v519 = vmax.f32 %v517, %v518
      %v520 = vrot.slane %v519, 1
      %v521 = vmax.f32 %v519, %v520
      %v522 = vrot.slane %v489, 4
      %v523 = vmax.f32 %v489, %v522
      %v524 = vrot.slane %v523, 2
      %v525 = vmax.f32 %v523, %v524
      %v526 = vrot.slane %v525, 1
      %v527 = vmax.f32 %v525, %v526
      %v528 = vrot.slane %v490, 4
      %v529 = vmax.f32 %v490, %v528
      %v530 = vrot.slane %v529, 2
      %v531 = vmax.f32 %v529, %v530
      %v532 = vrot.slane %v531, 1
      %v533 = vmax.f32 %v531, %v532
      %v534 = vrot.slane %v491, 4
      %v535 = vmax.f32 %v491, %v534
      %v536 = vrot.slane %v535, 2
      %v537 = vmax.f32 %v535, %v536
      %v538 = vrot.slane %v537, 1
      %v539 = vmax.f32 %v537, %v538
      %vm548 = vcmask 1041409
      %v549 = vsel %vm548, %v503, %v497
      %vm550 = vcmask 1042434
      %v551 = vsel %vm550, %v509, %v549
      %vm552 = vcmask 1043459
      %v553 = vsel %vm552, %v515, %v551
      %vm554 = vcmask 1044484
      %v555 = vsel %vm554, %v521, %v553
      %vm556 = vcmask 1045509
      %v557 = vsel %vm556, %v527, %v555
      %vm558 = vcmask 1046534
      %v559 = vsel %vm558, %v533, %v557
      %vm560 = vcmask 1047559
      %v561 = vsel %vm560, %v539, %v559
      %563 = vxpose.xlu0.b32.start [1/16] %v561, 128
      %564 = vxpose.xlu0.b32.cont [2/16] 0.0, 128
      %565 = vxpose.xlu0.b32.cont [3/16] 0.0, 128
      %566 = vxpose.xlu0.b32.cont [4/16] 0.0, 128
      %567 = vxpose.xlu0.b32.cont [5/16] 0.0, 128
      %568 = vxpose.xlu0.b32.cont [6/16] 0.0, 128
      %569 = vxpose.xlu0.b32.cont [7/16] 0.0, 128
      %570 = vxpose.xlu0.b32.cont [8/16] 0.0, 128
      %571 = vxpose.xlu0.b32.cont [9/16] 0.0, 128
      %572 = vxpose.xlu0.b32.cont [10/16] 0.0, 128
      %573 = vxpose.xlu0.b32.cont [11/16] 0.0, 128
      %574 = vxpose.xlu0.b32.cont [12/16] 0.0, 128
      %575 = vxpose.xlu0.b32.cont [13/16] 0.0, 128
      %576 = vxpose.xlu0.b32.cont [14/16] 0.0, 128
      %577 = vxpose.xlu0.b32.cont [15/16] 0.0, 128
      %578 = vxpose.xlu0.b32.end [16/16] 0.0, 128
      %v579 = vpop.trf.xlu0
      %v580 = vpop.trf.xlu0
      %v581 = vpop.trf.xlu0
      %v582 = vpop.trf.xlu0
      %v583 = vpop.trf.xlu0
      %v584 = vpop.trf.xlu0
      %v585 = vpop.trf.xlu0
      %v586 = vpop.trf.xlu0
      %v587 = vpop.trf.xlu0
      %v588 = vpop.trf.xlu0
      %v589 = vpop.trf.xlu0
      %v590 = vpop.trf.xlu0
      %v591 = vpop.trf.xlu0
      %v592 = vpop.trf.xlu0
      %v593 = vpop.trf.xlu0
      %v594 = vpop.trf.xlu0
      %595 = vst.msk [vmem:[%s260] sm:$0xff] %vm403, %v579
      %596 = vst.msk [vmem:[%s260 + $0x8] sm:$0xff] %vm403, %v580
      %597 = vst.msk [vmem:[%s260 + $0x10] sm:$0xff] %vm403, %v581
      %598 = vst.msk [vmem:[%s260 + $0x18] sm:$0xff] %vm403, %v582
      %599 = vst.msk [vmem:[%s260 + $0x20] sm:$0xff] %vm403, %v583
      %600 = vst.msk [vmem:[%s260 + $0x28] sm:$0xff] %vm403, %v584
      %601 = vst.msk [vmem:[%s260 + $0x30] sm:$0xff] %vm403, %v585
      %602 = vst.msk [vmem:[%s260 + $0x38] sm:$0xff] %vm403, %v586
      %603 = vst.msk [vmem:[%s260 + $0x40] sm:$0xff] %vm403, %v587
      %604 = vst.msk [vmem:[%s260 + $0x48] sm:$0xff] %vm403, %v588
      %605 = vst.msk [vmem:[%s260 + $0x50] sm:$0xff] %vm403, %v589
      %606 = vst.msk [vmem:[%s260 + $0x58] sm:$0xff] %vm403, %v590
      %607 = vst.msk [vmem:[%s260 + $0x60] sm:$0xff] %vm403, %v591
      %608 = vst.msk [vmem:[%s260 + $0x68] sm:$0xff] %vm403, %v592
      %609 = vst.msk [vmem:[%s260 + $0x70] sm:$0xff] %vm403, %v593
      %610 = vst.msk [vmem:[%s260 + $0x78] sm:$0xff] %vm403, %v594
      %p611 = scmp.lt.s32.totalorder %s20, 1
      %s612 = scalar_select %p611, %s20, 1
      %p613 = scmp.lt.s32.totalorder %s21, 0
      %s614 = scalar_select %p613, %s21, 0
      %s615 = smul.addr %s612, 16
      %s616 = sadd.s32 %s614, %s615
      %s617 = smul.addr %s616, 8
      %s618 = scalar_lea.vmem %s5, %s617
      // Predicated region
      $region41: #{pointnet_sa_module_msg.2} parent=39 // pred_check
        %p619 = pneg %p160
      $region42: #{pointnet_sa_module_msg.2} parent=39 // pred_check_branch
        %621 = sbr.rel (%p619) target = $region44
      $region43: #{pointnet_sa_module_msg.2} parent=39 // pred_region
        _
      $region44: #{pointnet_sa_module_msg.2} parent=39 // pred_fallthru
        _
    $region40: #{pointnet_sa_module_msg.2} parent=5 // pred_fallthru
      _
    %p622 = scmp.le.s32.totalorder 2, %s11
    // Predicated region
    $region45: #{pointnet_sa_module_msg.2} parent=5 // pred_check
      %p623 = pneg %p622
    $region46: #{pointnet_sa_module_msg.2} parent=5 // pred_check_branch
      %625 = sbr.rel (%p623) target = $region48
    $region47: #{pointnet_sa_module_msg.2} parent=5 // pred_region
      %s626 = ssub.s32 %s11, 2
      // Predicated region
      $region49: #{pointnet_sa_module_msg.2} parent=47 // pred_check
        %p627 = pneg %p166
      $region50: #{pointnet_sa_module_msg.2} parent=47 // pred_check_branch
        %629 = sbr.rel (%p627) target = $region52
      $region51: #{pointnet_sa_module_msg.2} parent=47 // pred_region
        %p630 = scmp.lt.s32.totalorder %s22, 1
        %s631 = scalar_select %p630, %s22, 1
        %p632 = scmp.lt.s32.totalorder %s23, 0
        %s633 = scalar_select %p632, %s23, 0
        %s634 = smul.addr %s631, 16
        %s635 = sadd.s32 %s633, %s634
        %s636 = smul.addr %s635, 8
        %s637 = scalar_lea.vmem %s5, %s636
      $region52: #{pointnet_sa_module_msg.2} parent=47 // pred_fallthru
        _
    $region48: #{pointnet_sa_module_msg.2} parent=5 // pred_fallthru
      _
  $region6: #{pointnet_sa_module_msg.2} parent=0 // loop_footer
    %s15 = sadd.s32 1, %s11
  $region7: #{pointnet_sa_module_msg.2} parent=0 // loop_footer_branch
    %10 = sbr.rel target = $region3
  $region8: #{pointnet_sa_module_msg.2} parent=0 // loop_exit
    _

// kernel: pointnet_sa_module_msg.3
$region0: #{pointnet_sa_module_msg.3}
  #allocation0 [shape = 'u32[]', space=smem, size = 0x4, offset = 0x4, fixed_abs, tag = 'smem constant byte address 0x4 - core index']
  #allocation1 [shape = 'u32[144,128]{1,0:T(1,128)}', space=vmem, size = 0x12000, scoped, tag = 'internal scratch']
  %s0 = inlined_call_operand.vmem [shape: bf16[2,8,16,7], index: 0, kind: input, shape index: {}]
  %s1 = inlined_call_operand.vmem [shape: bf16[7,8], index: 1, kind: input, shape index: {}]
  %s2 = inlined_call_operand.vmem [shape: f32[1,8], index: 2, kind: input, shape index: {}]
  %s3 = inlined_call_operand.vmem [shape: bf16[8,128], index: 3, kind: input, shape index: {}]
  %s4 = inlined_call_operand.vmem [shape: f32[1,128], index: 4, kind: input, shape index: {}]
  %s5 = inlined_call_operand.vmem [shape: f32[2,128,8], index: 5, kind: output, shape index: {}]
  %s6 = sld [smem:[#allocation0]]
  $region53: #{pointnet_sa_module_msg.3} parent=0
    _
  %s8 = ssub.s32 1, %s6
  %s9 = scalar_select 0, %s8, %s6
  loop: start=0, step=1, limit=4
  $region2: #{pointnet_sa_module_msg.3} parent=0 // loop_pre_header
    _
  $region3: #{pointnet_sa_module_msg.3} parent=0 // loop_header
    %s11 = sphi 0, %s15
    %p12 = scmp.ge.s32.totalorder %s11, 4
    %s18 = sphi 0, %s30
    %s19 = sphi 0, %s26
    %s20 = sphi 0, %s18
    %s21 = sphi 0, %s19
    %s22 = sphi 0, %s20
    %s23 = sphi 0, %s21
    %s35 = sphi 0, %s37
    %s38 = sphi 0, %s35
    %s39 = sphi 0, %s38
    %s55 = sphi 0, %s39
    %s59 = sphi 0, %s59
    %s61 = sphi 0, %s59
    %s62 = sphi 0, %s61
    %s76 = sphi 0, %s62
    %s80 = sphi 0, %s80
    %s82 = sphi 0, %s80
    %s83 = sphi 0, %s82
    %s97 = sphi 0, %s83
    %s101 = sphi 0, %s101
    %s103 = sphi 0, %s101
    %s104 = sphi 0, %s103
    %s118 = sphi 0, %s104
    %s122 = sphi 0, %s122
    %s124 = sphi 0, %s122
    %s125 = sphi 0, %s124
    %s139 = sphi 0, %s125
    %s147 = sphi 0, %s149
    %s150 = sphi 0, %s147
    %s151 = sphi 0, %s150
    %s167 = sphi 0, %s151
  $region4: #{pointnet_sa_module_msg.3} parent=0 // loop_header_branch
    %14 = sbr.rel (%p12) target = $region8
  $region5: #{pointnet_sa_module_msg.3} parent=0 // loop_body
    %s16 = ssub.s32 %s11, 1
    %s17 = ssub.s32 %s11, 2
    %s24 = sadd.s32 1, %s19
    %p25 = scmp.ge.s32.totalorder %s24, 1
    %s26 = scalar_select %p25, 0, %s24
    %s27 = sadd.s32 1, %s18
    %s28 = scalar_select %p25, %s27, %s18
    %p29 = scmp.ge.s32.totalorder %s28, 2
    %s30 = scalar_select %p29, 0, %s28
    %s31 = ssub.s32 %s18, %s30
    %s32 = ssub.s32 %s19, %s26
    %s33 = sor.u32 %s31, %s32
    %p34 = scmp.eq.s32.totalorder %s33, 0
    %s36 = sadd.s32 %s35, 1
    %s37 = scalar_select %p34, %s35, %s36
    %p40 = pneg %p34
    %p41 = scmp.eq.s32.totalorder %s11, 1
    %p42 = por %p40, %p41
    %p43 = scmp.ne.s32.totalorder %s35, %s38
    %p44 = scmp.eq.s32.totalorder %s11, 0
    %p45 = por %p43, %p44
    %p46 = scmp.ne.s32.totalorder %s35, %s38
    %p47 = scmp.eq.s32.totalorder %s16, 1
    %p48 = por %p46, %p47
    %p49 = scmp.ne.s32.totalorder %s38, %s39
    %p50 = scmp.eq.s32.totalorder %s16, 0
    %p51 = por %p49, %p50
    %p52 = scmp.ne.s32.totalorder %s38, %s39
    %p53 = scmp.eq.s32.totalorder %s17, 1
    %p54 = por %p52, %p53
    %p56 = scmp.ne.s32.totalorder %s39, %s55
    %p57 = scmp.eq.s32.totalorder %s17, 0
    %p58 = por %p56, %p57
    %s60 = sadd.s32 %s59, 1
    %p63 = scmp.eq.s32.totalorder %s11, 1
    %p64 = scmp.ne.s32.totalorder %s59, %s61
    %p65 = scmp.eq.s32.totalorder %s11, 0
    %p66 = por %p64, %p65
    %p67 = scmp.ne.s32.totalorder %s59, %s61
    %p68 = scmp.eq.s32.totalorder %s16, 1
    %p69 = por %p67, %p68
    %p70 = scmp.ne.s32.totalorder %s61, %s62
    %p71 = scmp.eq.s32.totalorder %s16, 0
    %p72 = por %p70, %p71
    %p73 = scmp.ne.s32.totalorder %s61, %s62
    %p74 = scmp.eq.s32.totalorder %s17, 1
    %p75 = por %p73, %p74
    %p77 = scmp.ne.s32.totalorder %s62, %s76
    %p78 = scmp.eq.s32.totalorder %s17, 0
    %p79 = por %p77, %p78
    %s81 = sadd.s32 %s80, 1
    %p84 = scmp.eq.s32.totalorder %s11, 1
    %p85 = scmp.ne.s32.totalorder %s80, %s82
    %p86 = scmp.eq.s32.totalorder %s11, 0
    %p87 = por %p85, %p86
    %p88 = scmp.ne.s32.totalorder %s80, %s82
    %p89 = scmp.eq.s32.totalorder %s16, 1
    %p90 = por %p88, %p89
    %p91 = scmp.ne.s32.totalorder %s82, %s83
    %p92 = scmp.eq.s32.totalorder %s16, 0
    %p93 = por %p91, %p92
    %p94 = scmp.ne.s32.totalorder %s82, %s83
    %p95 = scmp.eq.s32.totalorder %s17, 1
    %p96 = por %p94, %p95
    %p98 = scmp.ne.s32.totalorder %s83, %s97
    %p99 = scmp.eq.s32.totalorder %s17, 0
    %p100 = por %p98, %p99
    %s102 = sadd.s32 %s101, 1
    %p105 = scmp.eq.s32.totalorder %s11, 1
    %p106 = scmp.ne.s32.totalorder %s101, %s103
    %p107 = scmp.eq.s32.totalorder %s11, 0
    %p108 = por %p106, %p107
    %p109 = scmp.ne.s32.totalorder %s101, %s103
    %p110 = scmp.eq.s32.totalorder %s16, 1
    %p111 = por %p109, %p110
    %p112 = scmp.ne.s32.totalorder %s103, %s104
    %p113 = scmp.eq.s32.totalorder %s16, 0
    %p114 = por %p112, %p113
    %p115 = scmp.ne.s32.totalorder %s103, %s104
    %p116 = scmp.eq.s32.totalorder %s17, 1
    %p117 = por %p115, %p116
    %p119 = scmp.ne.s32.totalorder %s104, %s118
    %p120 = scmp.eq.s32.totalorder %s17, 0
    %p121 = por %p119, %p120
    %s123 = sadd.s32 %s122, 1
    %p126 = scmp.eq.s32.totalorder %s11, 1
    %p127 = scmp.ne.s32.totalorder %s122, %s124
    %p128 = scmp.eq.s32.totalorder %s11, 0
    %p129 = por %p127, %p128
    %p130 = scmp.ne.s32.totalorder %s122, %s124
    %p131 = scmp.eq.s32.totalorder %s16, 1
    %p132 = por %p130, %p131
    %p133 = scmp.ne.s32.totalorder %s124, %s125
    %p134 = scmp.eq.s32.totalorder %s16, 0
    %p135 = por %p133, %p134
    %p136 = scmp.ne.s32.totalorder %s124, %s125
    %p137 = scmp.eq.s32.totalorder %s17, 1
    %p138 = por %p136, %p137
    %p140 = scmp.ne.s32.totalorder %s125, %s139
    %p141 = scmp.eq.s32.totalorder %s17, 0
    %p142 = por %p140, %p141
    %s143 = ssub.s32 %s18, %s30
    %s144 = ssub.s32 %s19, %s26
    %s145 = sor.u32 %s143, %s144
    %p146 = scmp.eq.s32.totalorder %s145, 0
    %s148 = sadd.s32 %s147, 1
    %s149 = scalar_select %p146, %s147, %s148
    %p152 = pneg %p146
    %p153 = scmp.eq.s32.totalorder %s11, 1
    %p154 = por %p152, %p153
    %p155 = scmp.ne.s32.totalorder %s147, %s150
    %p156 = scmp.eq.s32.totalorder %s11, 0
    %p157 = por %p155, %p156
    %p158 = scmp.ne.s32.totalorder %s147, %s150
    %p159 = scmp.eq.s32.totalorder %s16, 1
    %p160 = por %p158, %p159
    %p161 = scmp.ne.s32.totalorder %s150, %s151
    %p162 = scmp.eq.s32.totalorder %s16, 0
    %p163 = por %p161, %p162
    %p164 = scmp.ne.s32.totalorder %s150, %s151
    %p165 = scmp.eq.s32.totalorder %s17, 1
    %p166 = por %p164, %p165
    %p168 = scmp.ne.s32.totalorder %s151, %s167
    %p169 = scmp.eq.s32.totalorder %s17, 0
    %p170 = por %p168, %p169
    %p171 = scmp.le.s32.totalorder 1, %s11
    %p172 = scmp.lt.s32.totalorder %s11, 3
    %p173 = pnand %p171, %p172
    %p174 = pneg %p173
    // Predicated region
    $region9: #{pointnet_sa_module_msg.3} parent=5 // pred_check
      _
    $region10: #{pointnet_sa_module_msg.3} parent=5 // pred_check_branch
      %176 = sbr.rel (%p173) target = $region12
    $region11: #{pointnet_sa_module_msg.3} parent=5 // pred_region
      %s177 = ssub.s32 %s11, 1
      // Predicated region
      $region13: #{pointnet_sa_module_msg.3} parent=11 // pred_check
        %p178 = pneg %p72
      $region14: #{pointnet_sa_module_msg.3} parent=11 // pred_check_branch
        %180 = sbr.rel (%p178) target = $region16
      $region15: #{pointnet_sa_module_msg.3} parent=11 // pred_region
        _
      $region16: #{pointnet_sa_module_msg.3} parent=11 // pred_fallthru
        _
      // Predicated region
      $region17: #{pointnet_sa_module_msg.3} parent=11 // pred_check
        %p181 = pneg %p93
      $region18: #{pointnet_sa_module_msg.3} parent=11 // pred_check_branch
        %183 = sbr.rel (%p181) target = $region20
      $region19: #{pointnet_sa_module_msg.3} parent=11 // pred_region
        _
      $region20: #{pointnet_sa_module_msg.3} parent=11 // pred_fallthru
        _
      // Predicated region
      $region21: #{pointnet_sa_module_msg.3} parent=11 // pred_check
        %p184 = pneg %p114
      $region22: #{pointnet_sa_module_msg.3} parent=11 // pred_check_branch
        %186 = sbr.rel (%p184) target = $region24
      $region23: #{pointnet_sa_module_msg.3} parent=11 // pred_region
        _
      $region24: #{pointnet_sa_module_msg.3} parent=11 // pred_fallthru
        _
      // Predicated region
      $region25: #{pointnet_sa_module_msg.3} parent=11 // pred_check
        %p187 = pneg %p135
      $region26: #{pointnet_sa_module_msg.3} parent=11 // pred_check_branch
        %189 = sbr.rel (%p187) target = $region28
      $region27: #{pointnet_sa_module_msg.3} parent=11 // pred_region
        _
      $region28: #{pointnet_sa_module_msg.3} parent=11 // pred_fallthru
        _
    $region12: #{pointnet_sa_module_msg.3} parent=5 // pred_fallthru
      _
    %p190 = scmp.lt.s32.totalorder %s11, 2
    // Predicated region
    $region29: #{pointnet_sa_module_msg.3} parent=5 // pred_check
      %p191 = pneg %p190
    $region30: #{pointnet_sa_module_msg.3} parent=5 // pred_check_branch
      %193 = sbr.rel (%p191) target = $region32
    $region31: #{pointnet_sa_module_msg.3} parent=5 // pred_region
      // Predicated region
      $region33: #{pointnet_sa_module_msg.3} parent=31 // pred_check
        %p194 = pneg %p45
      $region34: #{pointnet_sa_module_msg.3} parent=31 // pred_check_branch
        %196 = sbr.rel (%p194) target = $region36
      $region35: #{pointnet_sa_module_msg.3} parent=31 // pred_region
        %s197 = smul.u32 8, %s19
        %p198 = scmp.lt.s32.totalorder %s18, 1
        %s199 = scalar_select %p198, %s18, 1
        %p200 = scmp.lt.s32.totalorder %s197, 7
        %s201 = scalar_select %p200, %s197, 7
        %s202 = smul.addr %s201, 2
        %s203 = smul.addr %s199, 16
        %s204 = sadd.s32 %s202, %s203
        %s205 = smul.addr %s204, 4
        %s206 = scalar_lea.vmem %s0, %s205
        %s207 = smul.u32 8, %s19
      $region36: #{pointnet_sa_module_msg.3} parent=31 // pred_fallthru
        _
    $region32: #{pointnet_sa_module_msg.3} parent=5 // pred_fallthru
      _
    %p208 = scmp.le.s32.totalorder 1, %s11
    %p209 = scmp.lt.s32.totalorder %s11, 3
    %p210 = pnand %p208, %p209
    %p211 = pneg %p210
    // Predicated region
    $region37: #{pointnet_sa_module_msg.3} parent=5 // pred_check
      _
    $region38: #{pointnet_sa_module_msg.3} parent=5 // pred_check_branch
      %213 = sbr.rel (%p210) target = $region40
    $region39: #{pointnet_sa_module_msg.3} parent=5 // pred_region
      %s214 = ssub.s32 %s11, 1
      %s215 = smul.u32 8, %s21
      %p216 = scmp.lt.s32.totalorder %s20, 1
      %s217 = scalar_select %p216, %s20, 1
      %p218 = scmp.lt.s32.totalorder %s215, 7
      %s219 = scalar_select %p218, %s215, 7
      %s220 = smul.addr %s219, 2
      %s221 = smul.addr %s217, 16
      %s222 = sadd.s32 %s220, %s221
      %s223 = smul.addr %s222, 4
      %s224 = scalar_lea.vmem %s0, %s223
      %p225 = pneg %p51
      %p226 = pneg %p48
      %p227 = pneg %p72
      %p228 = pneg %p69
      %p229 = pneg %p93
      %p230 = pneg %p90
      %p231 = pneg %p114
      %p232 = pneg %p111
      %p233 = pneg %p135
      %p234 = pneg %p132
      %p235 = pneg %p163
      %p236 = pneg %p160
      %p237 = scmp.lt.s32.totalorder %s20, 1
      %s238 = scalar_select %p237, %s20, 1
      %p239 = scmp.lt.s32.totalorder %s21, 0
      %s240 = scalar_select %p239, %s21, 0
      %s241 = smul.addr %s238, 16
      %s242 = sadd.s32 %s240, %s241
      %s243 = smul.addr %s242, 8
      %s244 = scalar_lea.vmem %s5, %s243
      %s245 = smul.u32 8, %s21
      %p246 = scmp.lt.s32.totalorder %s20, 1
      %s247 = scalar_select %p246, %s20, 1
      %p248 = scmp.lt.s32.totalorder %s245, 7
      %s249 = scalar_select %p248, %s245, 7
      %s250 = smul.addr %s249, 2
      %s251 = smul.addr %s247, 16
      %s252 = sadd.s32 %s250, %s251
      %s253 = smul.addr %s252, 4
      %s254 = scalar_lea.vmem %s0, %s253
      %s255 = smul.u32 8, %s21
      %p256 = scmp.lt.s32.totalorder %s20, 1
      %s257 = scalar_select %p256, %s20, 1
      %p258 = scmp.lt.s32.totalorder %s21, 0
      %s259 = scalar_select %p258, %s21, 0
      %s260 = smul.addr %s257, 16
      %s261 = sadd.s32 %s259, %s260
      %s262 = smul.addr %s261, 8
      %s263 = scalar_lea.vmem %s5, %s262
      %v265 = vld [vmem:[%s254] sm:$0xf]
      %v266 = vld [vmem:[%s254 + $0x4] sm:$0xf]
      %v267 = vld [vmem:[%s254 + $0x8] sm:$0xf]
      %v268 = vld [vmem:[%s254 + $0xc] sm:$0xf]
      %v269 = vld [vmem:[%s254 + $0x10] sm:$0xf]
      %v270 = vld [vmem:[%s254 + $0x14] sm:$0xf]
      %v271 = vld [vmem:[%s254 + $0x18] sm:$0xf]
      %v272 = vld [vmem:[%s254 + $0x1c] sm:$0xf]
      %v273 = vld [vmem:[%s254 + $0x20] sm:$0xf]
      %v274 = vld [vmem:[%s254 + $0x24] sm:$0xf]
      %v275 = vld [vmem:[%s254 + $0x28] sm:$0xf]
      %v276 = vld [vmem:[%s254 + $0x2c] sm:$0xf]
      %v277 = vld [vmem:[%s254 + $0x30] sm:$0xf]
      %v278 = vld [vmem:[%s254 + $0x34] sm:$0xf]
      %v279 = vld [vmem:[%s254 + $0x38] sm:$0xf]
      %v280 = vld [vmem:[%s254 + $0x3c] sm:$0xf]
      %v281 = vld [vmem:[%s1] sm:$0xf]
      %v282 = vld [vmem:[%s2] sm:$0x1]
      %v284 = vlaneseq
      %v285 = vshrl.u32 %v284, 7
      %v286 = vsub.s32 0, %v285
      %v287 = vrot.slane %v282, %v286
      %v305 = vunpack.c.l.b16 %v265
      %v306 = vunpack.c.l.b16 %v266
      %v307 = vunpack.c.l.b16 %v267
      %v308 = vunpack.c.l.b16 %v268
      %v309 = vunpack.c.l.b16 %v269
      %v310 = vunpack.c.l.b16 %v270
      %v311 = vunpack.c.l.b16 %v271
      %v312 = vunpack.c.l.b16 %v272
      %v313 = vunpack.c.l.b16 %v273
      %v314 = vunpack.c.l.b16 %v274
      %v315 = vunpack.c.l.b16 %v275
      %v316 = vunpack.c.l.b16 %v276
      %v317 = vunpack.c.l.b16 %v277
      %v318 = vunpack.c.l.b16 %v278
      %v319 = vunpack.c.l.b16 %v279
      %v320 = vunpack.c.l.b16 %v280
      %v321 = vpack.c.b16 %v306, %v305
      %v322 = vpack.c.b16 %v308, %v307
      %v323 = vpack.c.b16 %v310, %v309
      %v324 = vpack.c.b16 %v312, %v311
      %v325 = vpack.c.b16 %v314, %v313
      %v326 = vpack.c.b16 %v316, %v315
      %v327 = vpack.c.b16 %v318, %v317
      %v328 = vpack.c.b16 %v320, %v319
      %vm329 = vcmask 56320
      %v331 = vsel %vm329, %v321, 0
      %v334 = vsel %vm329, %v322, 0
      %v337 = vsel %vm329, %v323, 0
      %v340 = vsel %vm329, %v324, 0
      %v343 = vsel %vm329, %v325, 0
      %v346 = vsel %vm329, %v326, 0
      %v349 = vsel %vm329, %v327, 0
      %v352 = vsel %vm329, %v328, 0
      %vm354 = vcmask 1042432
      %vm355 = vcmask 1043456
      %v356 = vsel %vm354, 4294967295, 65535
      %v357 = vsel %vm355, %v356, 0
      %v359 = vand.u32 %v281, %v357
      %361 = vmatprep.subr.bf16.mxu0 0
      %362 = vmatpush1.bf16.msra.mxu0 %v359
      %363 = vmatprep.subr.bf16.mxu0 0
      %364 = vmatpush1.bf16.msra.mxu0 0
      %365 = vmatprep.subr.bf16.mxu0 0
      %366 = vmatpush1.bf16.msra.mxu0 0
      %367 = vmatprep.subr.bf16.mxu0 0
      %368 = vmatpush1.bf16.msra.mxu0 0
      %369 = vmatprep.subr.bf16.mxu0 0
      %370 = vmatpush1.bf16.msra.mxu0 0
      %371 = vmatprep.subr.bf16.mxu0 0
      %372 = vmatpush1.bf16.msra.mxu0 0
      %373 = vmatprep.subr.bf16.mxu0 0
      %374 = vmatpush1.bf16.msra.mxu0 0
      %375 = vmatprep.subr.bf16.mxu0 0
      %376 = vmatpush1.bf16.msra.mxu0 0
      %377 = vmatprep.subr.bf16.mxu0 0
      %378 = vmatpush1.bf16.msra.mxu0 0
      %379 = vmatprep.subr.bf16.mxu0 0
      %380 = vmatpush1.bf16.msra.mxu0 0
      %381 = vmatprep.subr.bf16.mxu0 0
      %382 = vmatpush1.bf16.msra.mxu0 0
      %383 = vmatprep.subr.bf16.mxu0 0
      %384 = vmatpush1.bf16.msra.mxu0 0
      %385 = vmatprep.subr.bf16.mxu0 0
      %386 = vmatpush1.bf16.msra.mxu0 0
      %387 = vmatprep.subr.bf16.mxu0 0
      %388 = vmatpush1.bf16.msra.mxu0 0
      %389 = vmatprep.subr.bf16.mxu0 0
      %390 = vmatpush1.bf16.msra.mxu0 0
      %391 = vmatprep.subr.bf16.mxu0 0
      %392 = vmatpush1.bf16.msra.mxu0 0
      %393 = vmatprep.mubr.bf16.mxu0 0
      %394 = vmatmul.mubr.bf16.gmra.mrb[0].mxu0 %v331
      %v395 = vpop.f32.mrb[0].mxu0
      %v396 = vadd.f32 %v287, %v395
      %v397 = vpop.f32.mrb[0].mxu0
      %v398 = vpop.f32.mrb[0].mxu0
      %v399 = vadd.f32 %v287, %v398
      %v400 = vpop.f32.mrb[0].mxu0
      %401 = vmatprep.mubr.bf16.mxu0 0
      %402 = vmatmul.mubr.bf16.gmra.mrb[0].mxu0 %v334
      %v403 = vpop.f32.mrb[0].mxu0
      %v404 = vadd.f32 %v287, %v403
      %v405 = vpop.f32.mrb[0].mxu0
      %v406 = vpop.f32.mrb[0].mxu0
      %v407 = vadd.f32 %v287, %v406
      %v408 = vpop.f32.mrb[0].mxu0
      %409 = vmatprep.mubr.bf16.mxu0 0
      %410 = vmatmul.mubr.bf16.gmra.mrb[0].mxu0 %v337
      %v411 = vpop.f32.mrb[0].mxu0
      %v412 = vadd.f32 %v287, %v411
      %v413 = vpop.f32.mrb[0].mxu0
      %v414 = vpop.f32.mrb[0].mxu0
      %v415 = vadd.f32 %v287, %v414
      %v416 = vpop.f32.mrb[0].mxu0
      %417 = vmatprep.mubr.bf16.mxu0 0
      %418 = vmatmul.mubr.bf16.gmra.mrb[0].mxu0 %v340
      %v419 = vpop.f32.mrb[0].mxu0
      %v420 = vadd.f32 %v287, %v419
      %v421 = vpop.f32.mrb[0].mxu0
      %v422 = vpop.f32.mrb[0].mxu0
      %v423 = vadd.f32 %v287, %v422
      %v424 = vpop.f32.mrb[0].mxu0
      %425 = vmatprep.mubr.bf16.mxu0 0
      %426 = vmatmul.mubr.bf16.gmra.mrb[0].mxu0 %v343
      %v427 = vpop.f32.mrb[0].mxu0
      %v428 = vadd.f32 %v287, %v427
      %v429 = vpop.f32.mrb[0].mxu0
      %v430 = vpop.f32.mrb[0].mxu0
      %v431 = vadd.f32 %v287, %v430
      %v432 = vpop.f32.mrb[0].mxu0
      %433 = vmatprep.mubr.bf16.mxu0 0
      %434 = vmatmul.mubr.bf16.gmra.mrb[0].mxu0 %v346
      %v435 = vpop.f32.mrb[0].mxu0
      %v436 = vadd.f32 %v287, %v435
      %v437 = vpop.f32.mrb[0].mxu0
      %v438 = vpop.f32.mrb[0].mxu0
      %v439 = vadd.f32 %v287, %v438
      %v440 = vpop.f32.mrb[0].mxu0
      %441 = vmatprep.mubr.bf16.mxu0 0
      %442 = vmatmul.mubr.bf16.gmra.mrb[0].mxu0 %v349
      %v443 = vpop.f32.mrb[0].mxu0
      %v444 = vadd.f32 %v287, %v443
      %v445 = vpop.f32.mrb[0].mxu0
      %v446 = vpop.f32.mrb[0].mxu0
      %v447 = vadd.f32 %v287, %v446
      %v448 = vpop.f32.mrb[0].mxu0
      %449 = vmatprep.mubr.bf16.mxu0 0
      %450 = vmatmul.mubr.bf16.gmra.mrb[0].mxu0 %v352
      %v451 = vpop.f32.mrb[0].mxu0
      %v452 = vadd.f32 %v287, %v451
      %v453 = vpop.f32.mrb[0].mxu0
      %v454 = vpop.f32.mrb[0].mxu0
      %v455 = vadd.f32 %v287, %v454
      %v456 = vpop.f32.mrb[0].mxu0
      %457 = vdwg.mxu0
      %v458 = vmax.f32 %v396, 0.0
      %v459 = vmax.f32 %v399, 0.0
      %v460 = vmax.f32 %v404, 0.0
      %v461 = vmax.f32 %v407, 0.0
      %v462 = vmax.f32 %v412, 0.0
      %v463 = vmax.f32 %v415, 0.0
      %v464 = vmax.f32 %v420, 0.0
      %v465 = vmax.f32 %v423, 0.0
      %v466 = vmax.f32 %v428, 0.0
      %v467 = vmax.f32 %v431, 0.0
      %v468 = vmax.f32 %v436, 0.0
      %v469 = vmax.f32 %v439, 0.0
      %v470 = vmax.f32 %v444, 0.0
      %v471 = vmax.f32 %v447, 0.0
      %v472 = vmax.f32 %v452, 0.0
      %v473 = vmax.f32 %v455, 0.0
      %v474 = vpack.c.bf16 %v459, %v458
      %v475 = vpack.c.bf16 %v461, %v460
      %v476 = vpack.c.bf16 %v463, %v462
      %v477 = vpack.c.bf16 %v465, %v464
      %v478 = vpack.c.bf16 %v467, %v466
      %v479 = vpack.c.bf16 %v469, %v468
      %v480 = vpack.c.bf16 %v471, %v470
      %v481 = vpack.c.bf16 %v473, %v472
      %v482 = vld [vmem:[%s3] sm:$0xf]
      %v483 = vld [vmem:[%s4] sm:$0x1]
      %v485 = vlaneseq
      %v486 = vshrl.u32 %v485, 7
      %v487 = vsub.s32 0, %v486
      %v488 = vrot.slane %v483, %v487
      %vm490 = vcmask 64512
      %v492 = vsel %vm490, %v474, 0
      %v495 = vsel %vm490, %v475, 0
      %v498 = vsel %vm490, %v476, 0
      %v501 = vsel %vm490, %v477, 0
      %v504 = vsel %vm490, %v478, 0
      %v507 = vsel %vm490, %v479, 0
      %v510 = vsel %vm490, %v480, 0
      %v513 = vsel %vm490, %v481, 0
      %v516 = vsel %vm355, %v482, 0
      %518 = vmatprep.subr.bf16.mxu0 0
      %519 = vmatpush1.bf16.msra.mxu0 %v516
      %520 = vmatprep.subr.bf16.mxu0 0
      %521 = vmatpush1.bf16.msra.mxu0 0
      %522 = vmatprep.subr.bf16.mxu0 0
      %523 = vmatpush1.bf16.msra.mxu0 0
      %524 = vmatprep.subr.bf16.mxu0 0
      %525 = vmatpush1.bf16.msra.mxu0 0
      %526 = vmatprep.subr.bf16.mxu0 0
      %527 = vmatpush1.bf16.msra.mxu0 0
      %528 = vmatprep.subr.bf16.mxu0 0
      %529 = vmatpush1.bf16.msra.mxu0 0
      %530 = vmatprep.subr.bf16.mxu0 0
      %531 = vmatpush1.bf16.msra.mxu0 0
      %532 = vmatprep.subr.bf16.mxu0 0
      %533 = vmatpush1.bf16.msra.mxu0 0
      %534 = vmatprep.subr.bf16.mxu0 0
      %535 = vmatpush1.bf16.msra.mxu0 0
      %536 = vmatprep.subr.bf16.mxu0 0
      %537 = vmatpush1.bf16.msra.mxu0 0
      %538 = vmatprep.subr.bf16.mxu0 0
      %539 = vmatpush1.bf16.msra.mxu0 0
      %540 = vmatprep.subr.bf16.mxu0 0
      %541 = vmatpush1.bf16.msra.mxu0 0
      %542 = vmatprep.subr.bf16.mxu0 0
      %543 = vmatpush1.bf16.msra.mxu0 0
      %544 = vmatprep.subr.bf16.mxu0 0
      %545 = vmatpush1.bf16.msra.mxu0 0
      %546 = vmatprep.subr.bf16.mxu0 0
      %547 = vmatpush1.bf16.msra.mxu0 0
      %548 = vmatprep.subr.bf16.mxu0 0
      %549 = vmatpush1.bf16.msra.mxu0 0
      %550 = vmatprep.mubr.bf16.mxu0 0
      %551 = vmatmul.mubr.bf16.gmra.mrb[0].mxu0 %v492
      %v552 = vpop.f32.mrb[0].mxu0
      %v553 = vadd.f32 %v488, %v552
      %v554 = vpop.f32.mrb[0].mxu0
      %v555 = vpop.f32.mrb[0].mxu0
      %v556 = vadd.f32 %v488, %v555
      %v557 = vpop.f32.mrb[0].mxu0
      %558 = vmatprep.mubr.bf16.mxu0 0
      %559 = vmatmul.mubr.bf16.gmra.mrb[0].mxu0 %v495
      %v560 = vpop.f32.mrb[0].mxu0
      %v561 = vadd.f32 %v488, %v560
      %v562 = vpop.f32.mrb[0].mxu0
      %v563 = vpop.f32.mrb[0].mxu0
      %v564 = vadd.f32 %v488, %v563
      %v565 = vpop.f32.mrb[0].mxu0
      %566 = vmatprep.mubr.bf16.mxu0 0
      %567 = vmatmul.mubr.bf16.gmra.mrb[0].mxu0 %v498
      %v568 = vpop.f32.mrb[0].mxu0
      %v569 = vadd.f32 %v488, %v568
      %v570 = vpop.f32.mrb[0].mxu0
      %v571 = vpop.f32.mrb[0].mxu0
      %v572 = vadd.f32 %v488, %v571
      %v573 = vpop.f32.mrb[0].mxu0
      %574 = vmatprep.mubr.bf16.mxu0 0
      %575 = vmatmul.mubr.bf16.gmra.mrb[0].mxu0 %v501
      %v576 = vpop.f32.mrb[0].mxu0
      %v577 = vadd.f32 %v488, %v576
      %v578 = vpop.f32.mrb[0].mxu0
      %v579 = vpop.f32.mrb[0].mxu0
      %v580 = vadd.f32 %v488, %v579
      %v581 = vpop.f32.mrb[0].mxu0
      %582 = vmatprep.mubr.bf16.mxu0 0
      %583 = vmatmul.mubr.bf16.gmra.mrb[0].mxu0 %v504
      %v584 = vpop.f32.mrb[0].mxu0
      %v585 = vadd.f32 %v488, %v584
      %v586 = vpop.f32.mrb[0].mxu0
      %v587 = vpop.f32.mrb[0].mxu0
      %v588 = vadd.f32 %v488, %v587
      %v589 = vpop.f32.mrb[0].mxu0
      %590 = vmatprep.mubr.bf16.mxu0 0
      %591 = vmatmul.mubr.bf16.gmra.mrb[0].mxu0 %v507
      %v592 = vpop.f32.mrb[0].mxu0
      %v593 = vadd.f32 %v488, %v592
      %v594 = vpop.f32.mrb[0].mxu0
      %v595 = vpop.f32.mrb[0].mxu0
      %v596 = vadd.f32 %v488, %v595
      %v597 = vpop.f32.mrb[0].mxu0
      %598 = vmatprep.mubr.bf16.mxu0 0
      %599 = vmatmul.mubr.bf16.gmra.mrb[0].mxu0 %v510
      %v600 = vpop.f32.mrb[0].mxu0
      %v601 = vadd.f32 %v488, %v600
      %v602 = vpop.f32.mrb[0].mxu0
      %v603 = vpop.f32.mrb[0].mxu0
      %v604 = vadd.f32 %v488, %v603
      %v605 = vpop.f32.mrb[0].mxu0
      %606 = vmatprep.mubr.bf16.mxu0 0
      %607 = vmatmul.mubr.bf16.gmra.mrb[0].mxu0 %v513
      %v608 = vpop.f32.mrb[0].mxu0
      %v609 = vadd.f32 %v488, %v608
      %v610 = vpop.f32.mrb[0].mxu0
      %v611 = vpop.f32.mrb[0].mxu0
      %v612 = vadd.f32 %v488, %v611
      %v613 = vpop.f32.mrb[0].mxu0
      %614 = vdwg.mxu0
      %v615 = vmax.f32 %v553, 0.0
      %v616 = vmax.f32 %v556, 0.0
      %v617 = vmax.f32 %v561, 0.0
      %v618 = vmax.f32 %v564, 0.0
      %v619 = vmax.f32 %v569, 0.0
      %v620 = vmax.f32 %v572, 0.0
      %v621 = vmax.f32 %v577, 0.0
      %v622 = vmax.f32 %v580, 0.0
      %v623 = vmax.f32 %v585, 0.0
      %v624 = vmax.f32 %v588, 0.0
      %v625 = vmax.f32 %v593, 0.0
      %v626 = vmax.f32 %v596, 0.0
      %v627 = vmax.f32 %v601, 0.0
      %v628 = vmax.f32 %v604, 0.0
      %v629 = vmax.f32 %v609, 0.0
      %v630 = vmax.f32 %v612, 0.0
      %v631 = vmax.f32 %v615, %v616
      %v632 = vrot.slane %v631, 4
      %v633 = vmax.f32 %v631, %v632
      %v634 = vrot.slane %v633, 2
      %v635 = vmax.f32 %v633, %v634
      %v636 = vrot.slane %v635, 1
      %v637 = vmax.f32 %v635, %v636
      %v638 = vmax.f32 %v617, %v618
      %v639 = vrot.slane %v638, 4
      %v640 = vmax.f32 %v638, %v639
      %v641 = vrot.slane %v640, 2
      %v642 = vmax.f32 %v640, %v641
      %v643 = vrot.slane %v642, 1
      %v644 = vmax.f32 %v642, %v643
      %v645 = vmax.f32 %v619, %v620
      %v646 = vrot.slane %v645, 4
      %v647 = vmax.f32 %v645, %v646
      %v648 = vrot.slane %v647, 2
      %v649 = vmax.f32 %v647, %v648
      %v650 = vrot.slane %v649, 1
      %v651 = vmax.f32 %v649, %v650
      %v652 = vmax.f32 %v621, %v622
      %v653 = vrot.slane %v652, 4
      %v654 = vmax.f32 %v652, %v653
      %v655 = vrot.slane %v654, 2
      %v656 = vmax.f32 %v654, %v655
      %v657 = vrot.slane %v656, 1
      %v658 = vmax.f32 %v656, %v657
      %v659 = vmax.f32 %v623, %v624
      %v660 = vrot.slane %v659, 4
      %v661 = vmax.f32 %v659, %v660
      %v662 = vrot.slane %v661, 2
      %v663 = vmax.f32 %v661, %v662
      %v664 = vrot.slane %v663, 1
      %v665 = vmax.f32 %v663, %v664
      %v666 = vmax.f32 %v625, %v626
      %v667 = vrot.slane %v666, 4
      %v668 = vmax.f32 %v666, %v667
      %v669 = vrot.slane %v668, 2
      %v670 = vmax.f32 %v668, %v669
      %v671 = vrot.slane %v670, 1
      %v672 = vmax.f32 %v670, %v671
      %v673 = vmax.f32 %v627, %v628
      %v674 = vrot.slane %v673, 4
      %v675 = vmax.f32 %v673, %v674
      %v676 = vrot.slane %v675, 2
      %v677 = vmax.f32 %v675, %v676
      %v678 = vrot.slane %v677, 1
      %v679 = vmax.f32 %v677, %v678
      %v680 = vmax.f32 %v629, %v630
      %v681 = vrot.slane %v680, 4
      %v682 = vmax.f32 %v680, %v681
      %v683 = vrot.slane %v682, 2
      %v684 = vmax.f32 %v682, %v683
      %v685 = vrot.slane %v684, 1
      %v686 = vmax.f32 %v684, %v685
      %vm695 = vcmask 1041409
      %v696 = vsel %vm695, %v644, %v637
      %vm697 = vcmask 1042434
      %v698 = vsel %vm697, %v651, %v696
      %vm699 = vcmask 1043459
      %v700 = vsel %vm699, %v658, %v698
      %vm701 = vcmask 1044484
      %v702 = vsel %vm701, %v665, %v700
      %vm703 = vcmask 1045509
      %v704 = vsel %vm703, %v672, %v702
      %vm705 = vcmask 1046534
      %v706 = vsel %vm705, %v679, %v704
      %vm707 = vcmask 1047559
      %v708 = vsel %vm707, %v686, %v706
      %710 = vxpose.xlu0.b32.start [1/16] %v708, 128
      %711 = vxpose.xlu0.b32.cont [2/16] 0.0, 128
      %712 = vxpose.xlu0.b32.cont [3/16] 0.0, 128
      %713 = vxpose.xlu0.b32.cont [4/16] 0.0, 128
      %714 = vxpose.xlu0.b32.cont [5/16] 0.0, 128
      %715 = vxpose.xlu0.b32.cont [6/16] 0.0, 128
      %716 = vxpose.xlu0.b32.cont [7/16] 0.0, 128
      %717 = vxpose.xlu0.b32.cont [8/16] 0.0, 128
      %718 = vxpose.xlu0.b32.cont [9/16] 0.0, 128
      %719 = vxpose.xlu0.b32.cont [10/16] 0.0, 128
      %720 = vxpose.xlu0.b32.cont [11/16] 0.0, 128
      %721 = vxpose.xlu0.b32.cont [12/16] 0.0, 128
      %722 = vxpose.xlu0.b32.cont [13/16] 0.0, 128
      %723 = vxpose.xlu0.b32.cont [14/16] 0.0, 128
      %724 = vxpose.xlu0.b32.cont [15/16] 0.0, 128
      %725 = vxpose.xlu0.b32.end [16/16] 0.0, 128
      %v726 = vpop.trf.xlu0
      %v727 = vpop.trf.xlu0
      %v728 = vpop.trf.xlu0
      %v729 = vpop.trf.xlu0
      %v730 = vpop.trf.xlu0
      %v731 = vpop.trf.xlu0
      %v732 = vpop.trf.xlu0
      %v733 = vpop.trf.xlu0
      %v734 = vpop.trf.xlu0
      %v735 = vpop.trf.xlu0
      %v736 = vpop.trf.xlu0
      %v737 = vpop.trf.xlu0
      %v738 = vpop.trf.xlu0
      %v739 = vpop.trf.xlu0
      %v740 = vpop.trf.xlu0
      %v741 = vpop.trf.xlu0
      %742 = vst.msk [vmem:[%s263] sm:$0xff] %vm490, %v726
      %743 = vst.msk [vmem:[%s263 + $0x8] sm:$0xff] %vm490, %v727
      %744 = vst.msk [vmem:[%s263 + $0x10] sm:$0xff] %vm490, %v728
      %745 = vst.msk [vmem:[%s263 + $0x18] sm:$0xff] %vm490, %v729
      %746 = vst.msk [vmem:[%s263 + $0x20] sm:$0xff] %vm490, %v730
      %747 = vst.msk [vmem:[%s263 + $0x28] sm:$0xff] %vm490, %v731
      %748 = vst.msk [vmem:[%s263 + $0x30] sm:$0xff] %vm490, %v732
      %749 = vst.msk [vmem:[%s263 + $0x38] sm:$0xff] %vm490, %v733
      %750 = vst.msk [vmem:[%s263 + $0x40] sm:$0xff] %vm490, %v734
      %751 = vst.msk [vmem:[%s263 + $0x48] sm:$0xff] %vm490, %v735
      %752 = vst.msk [vmem:[%s263 + $0x50] sm:$0xff] %vm490, %v736
      %753 = vst.msk [vmem:[%s263 + $0x58] sm:$0xff] %vm490, %v737
      %754 = vst.msk [vmem:[%s263 + $0x60] sm:$0xff] %vm490, %v738
      %755 = vst.msk [vmem:[%s263 + $0x68] sm:$0xff] %vm490, %v739
      %756 = vst.msk [vmem:[%s263 + $0x70] sm:$0xff] %vm490, %v740
      %757 = vst.msk [vmem:[%s263 + $0x78] sm:$0xff] %vm490, %v741
      %p758 = scmp.lt.s32.totalorder %s20, 1
      %s759 = scalar_select %p758, %s20, 1
      %p760 = scmp.lt.s32.totalorder %s21, 0
      %s761 = scalar_select %p760, %s21, 0
      %s762 = smul.addr %s759, 16
      %s763 = sadd.s32 %s761, %s762
      %s764 = smul.addr %s763, 8
      %s765 = scalar_lea.vmem %s5, %s764
      // Predicated region
      $region41: #{pointnet_sa_module_msg.3} parent=39 // pred_check
        %p766 = pneg %p160
      $region42: #{pointnet_sa_module_msg.3} parent=39 // pred_check_branch
        %768 = sbr.rel (%p766) target = $region44
      $region43: #{pointnet_sa_module_msg.3} parent=39 // pred_region
        _
      $region44: #{pointnet_sa_module_msg.3} parent=39 // pred_fallthru
        _
    $region40: #{pointnet_sa_module_msg.3} parent=5 // pred_fallthru
      _
    %p769 = scmp.le.s32.totalorder 2, %s11
    // Predicated region
    $region45: #{pointnet_sa_module_msg.3} parent=5 // pred_check
      %p770 = pneg %p769
    $region46: #{pointnet_sa_module_msg.3} parent=5 // pred_check_branch
      %772 = sbr.rel (%p770) target = $region48
    $region47: #{pointnet_sa_module_msg.3} parent=5 // pred_region
      %s773 = ssub.s32 %s11, 2
      // Predicated region
      $region49: #{pointnet_sa_module_msg.3} parent=47 // pred_check
        %p774 = pneg %p166
      $region50: #{pointnet_sa_module_msg.3} parent=47 // pred_check_branch
        %776 = sbr.rel (%p774) target = $region52
      $region51: #{pointnet_sa_module_msg.3} parent=47 // pred_region
        %p777 = scmp.lt.s32.totalorder %s22, 1
        %s778 = scalar_select %p777, %s22, 1
        %p779 = scmp.lt.s32.totalorder %s23, 0
        %s780 = scalar_select %p779, %s23, 0
        %s781 = smul.addr %s778, 16
        %s782 = sadd.s32 %s780, %s781
        %s783 = smul.addr %s782, 8
        %s784 = scalar_lea.vmem %s5, %s783
      $region52: #{pointnet_sa_module_msg.3} parent=47 // pred_fallthru
        _
    $region48: #{pointnet_sa_module_msg.3} parent=5 // pred_fallthru
      _
  $region6: #{pointnet_sa_module_msg.3} parent=0 // loop_footer
    %s15 = sadd.s32 1, %s11
  $region7: #{pointnet_sa_module_msg.3} parent=0 // loop_footer_branch
    %10 = sbr.rel target = $region3
  $region8: #{pointnet_sa_module_msg.3} parent=0 // loop_exit
    _

</llo_original>
